<compile_context>
chip_gen: v7x
topology: tpu7x:2x2x1
jax: 0.10.0
libtpu: 0.0.40
codegen_flags: <defaults>
</compile_context>

<pallas_src>
import numpy as np
import jax
import jax.numpy as jnp
from jax.experimental import pallas as pl
from jax.experimental.pallas import tpu as pltpu


# (H, W, Cin, Cout) per conv block: 8x8 -> 4x4 -> 2x2 -> 1x1 after 2x2 pooling.
_LAYERS = ((8, 8, 3, 16), (4, 4, 16, 32), (2, 2, 32, 32))
_N_CHANNEL = 32
_NUM_CLASSES = 10


def _round_up(v, m):
    return ((v + m - 1) // m) * m


def _geom(H, W):
    """Sublane-friendly flat padded-image geometry for one conv block."""
    Hp = H + 2                        # one zero-pad row top/bottom
    Wp = _round_up(W + 2, 8)          # padded row stride; multiple of 8 so the
                                      # +-Wp conv taps / pool offsets are aligned
    Mp = Hp * Wp                      # flat padded rows, row-major (hp, wp)
    slack = _round_up(Wp + 1, 8)      # 8-aligned headroom: shifted reads in bounds
    Tp = Mp + 2 * slack               # total rows of the padded scratch buffer
    Mwm = Mp - Wp - 1                 # rows for which the 2x2 window max exists
    return {"Hp": Hp, "Wp": Wp, "Mp": Mp, "slack": slack, "Tp": Tp, "Mwm": Mwm}


_GEOMS = tuple(_geom(H, W) for (H, W, _, _) in _LAYERS)


def _kernel(x_ref, w1_ref, b1_ref, w2_ref, b2_ref, w3_ref, b3_ref,
            fcw_ref, fcb_ref, feat_ref, logits_ref, p1_ref, p2_ref, p3_ref):
    """One grid step == one image: 3x(conv3x3+ReLU+maxpool2x2) + flatten + Linear."""
    p_refs = (p1_ref, p2_ref, p3_ref)
    w_refs = (w1_ref, w2_ref, w3_ref)
    b_refs = (b1_ref, b2_ref, b3_ref)

    # Pad-ring + slack rows must be exact zeros every step (buffers are tiny,
    # and with a "parallel" grid we cannot rely on a step-0-only init).
    for p in p_refs:
        p[...] = jnp.zeros_like(p)

    # Scatter this image's flat HWC rows straight into layer-1's padded buffer
    # (replaces the old O(N^2) selection matmul and its constant DMA).
    H0, W0, _, _ = _LAYERS[0]
    g0 = _GEOMS[0]
    for h in range(H0):
        dst = g0["slack"] + (h + 1) * g0["Wp"] + 1
        p1_ref[pl.ds(dst, W0), :] = x_ref[pl.ds(h * W0, W0), :]

    def conv_relu_pool(l):
        g = _GEOMS[l]
        Wp, Mp, slack, Mwm = g["Wp"], g["Mp"], g["slack"], g["Mwm"]
        # conv3x3 as ONE fat bf16 MXU matmul: lane-concatenate the 9 shifted
        # views of the flat padded buffer -> (Mp, 9*Cin) @ (9*Cin, Cout).
        taps = [p_refs[l][pl.ds(slack + (kh - 1) * Wp + (kw - 1), Mp), :]
                for kh in range(3) for kw in range(3)]
        lhs = jnp.concatenate(taps, axis=-1).astype(jnp.bfloat16)
        acc = jnp.dot(lhs, w_refs[l][...], preferred_element_type=jnp.float32)
        acc = jnp.maximum(acc + b_refs[l][...], 0.0)          # bias + ReLU (f32)
        # In-register separable 2x2/stride-2 max pool: window max anchored at
        # every flat row (no conv-output VMEM store / unaligned reloads).
        # Border/garbage rows are finite (zeroed buffer) and never selected.
        return jnp.maximum(
            jnp.maximum(acc[0:Mwm], acc[1:Mwm + 1]),
            jnp.maximum(acc[Wp:Wp + Mwm], acc[Wp + 1:Wp + 1 + Mwm]))

    wm = conv_relu_pool(0)
    for l in (1, 2):
        gp, gn = _GEOMS[l - 1], _GEOMS[l]
        Hn, Wn = _LAYERS[l][0], _LAYERS[l][1]
        # Scatter the valid pool anchors directly into the next padded buffer.
        for ho in range(Hn):
            for wo in range(Wn):
                src = (2 * ho + 1) * gp["Wp"] + (2 * wo + 1)
                dst = gn["slack"] + (ho + 1) * gn["Wp"] + (wo + 1)
                p_refs[l][pl.ds(dst, 1), :] = wm[src:src + 1, :]
        wm = conv_relu_pool(l)

    # Flatten: last block pools to 1x1x32 == torch's x.view(N, -1).
    g2 = _GEOMS[2]
    feat = wm[g2["Wp"] + 1:g2["Wp"] + 2, :]                   # (1, n_channel) f32
    feat_ref[...] = feat.astype(feat_ref.dtype)
    # Fused Linear classifier: (1, 32) @ (32, 10) bf16 MXU pass, f32 accum.
    logits_ref[...] = (jnp.dot(feat.astype(jnp.bfloat16), fcw_ref[...],
                               preferred_element_type=jnp.float32)
                       + fcb_ref[...]).astype(logits_ref.dtype)


def _const_spec(shape):
    nd = len(shape)
    return pl.BlockSpec(tuple(shape), lambda n, _nd=nd: (0,) * _nd)


def _fused_forward(x_rows, conv_ws, conv_bs, fc_w_t, fc_b, N):
    H0, W0, C0, _ = _LAYERS[0]
    args = [x_rows,
            conv_ws[0], conv_bs[0],
            conv_ws[1], conv_bs[1],
            conv_ws[2], conv_bs[2],
            fc_w_t, fc_b]
    in_specs = [pl.BlockSpec((None, H0 * W0, C0), lambda n: (n, 0, 0))]
    in_specs += [_const_spec(tuple(a.shape)) for a in args[1:]]
    # 3-D outputs so every block's last two dims equal the full array dims.
    out_shape = (jax.ShapeDtypeStruct((N, 1, _N_CHANNEL), jnp.float32),
                 jax.ShapeDtypeStruct((N, 1, _NUM_CLASSES), jnp.float32))
    out_specs = (pl.BlockSpec((None, 1, _N_CHANNEL), lambda n: (n, 0, 0)),
                 pl.BlockSpec((None, 1, _NUM_CLASSES), lambda n: (n, 0, 0)))
    scratch = [pltpu.VMEM((g["Tp"], cin), jnp.float32)
               for g, (_, _, cin, _) in zip(_GEOMS, _LAYERS)]

    feat, logits = pl.pallas_call(
        _kernel,
        out_shape=out_shape,
        grid=(N,),
        in_specs=in_specs,
        out_specs=out_specs,
        scratch_shapes=scratch,
        compiler_params=pltpu.CompilerParams(
            dimension_semantics=("parallel",)),
    )(*args)
    return feat.reshape(N, _N_CHANNEL), logits.reshape(N, _NUM_CLASSES)


@jax.jit
def svhn_forward(x_nchw, params):
    N, C, H, W = x_nchw.shape
    assert (H, W, C) == (_LAYERS[0][0], _LAYERS[0][1], _LAYERS[0][2]), \
        "this feature stack expects (N, 3, 8, 8) inputs"
    # Only wrapper-side glue: tiny NCHW -> flat channels-last relayout + param prep.
    x_rows = jnp.transpose(x_nchw, (0, 2, 3, 1)).reshape(N, H * W, C).astype(jnp.float32)
    conv_ws, conv_bs = [], []
    for (w, b), (_, _, cin, cout) in zip(params["features"], _LAYERS):
        assert w.shape == (3, 3, cin, cout) and b.shape == (cout,)
        conv_ws.append(w.reshape(9 * cin, cout).astype(jnp.bfloat16))  # (kh,kw,cin)-major
        conv_bs.append(b.reshape(1, cout).astype(jnp.float32))
    fc_w, fc_b = params["fc_w"], params["fc_b"]
    assert fc_w.shape == (_NUM_CLASSES, _N_CHANNEL)
    fc_w_t = fc_w.T.astype(jnp.bfloat16)                # (n_channel, num_classes)
    fc_b2 = fc_b.reshape(1, -1).astype(jnp.float32)
    return _fused_forward(x_rows, conv_ws, conv_bs, fc_w_t, fc_b2, N)


# ----------------------------------------------------------------------------
# References for correctness checking.
# ----------------------------------------------------------------------------
def reference_f32(x_nchw, params):
    """Pure-f32 reference of the module forward."""
    x = jnp.transpose(x_nchw, (0, 2, 3, 1))
    for (w, b) in params["features"]:
        y = jax.lax.conv_general_dilated(
            x, w, (1, 1), ((1, 1), (1, 1)),
            dimension_numbers=("NHWC", "HWIO", "NHWC"),
            precision=jax.lax.Precision.HIGHEST) + b
        y = jnp.maximum(y, 0.0)
        x = jax.lax.reduce_window(y, -jnp.inf, jax.lax.max,
                                  (1, 2, 2, 1), (1, 2, 2, 1), "VALID")
    feat = x.reshape(x.shape[0], -1)
    logits = jnp.dot(feat, params["fc_w"].T,
                     precision=jax.lax.Precision.HIGHEST) + params["fc_b"]
    return feat, logits


def reference_bf16_matched(x_nchw, params):
    """Same arithmetic as the kernel: bf16 matmul operands, f32 accumulation."""
    x = jnp.transpose(x_nchw, (0, 2, 3, 1))
    for (w, b) in params["features"]:
        y = jax.lax.conv_general_dilated(
            x.astype(jnp.bfloat16), w.astype(jnp.bfloat16),
            (1, 1), ((1, 1), (1, 1)),
            dimension_numbers=("NHWC", "HWIO", "NHWC"),
            preferred_element_type=jnp.float32) + b
        y = jnp.maximum(y, 0.0)
        x = jax.lax.reduce_window(y, -jnp.inf, jax.lax.max,
                                  (1, 2, 2, 1), (1, 2, 2, 1), "VALID")
    feat = x.reshape(x.shape[0], -1)
    logits = jnp.dot(feat.astype(jnp.bfloat16),
                     params["fc_w"].T.astype(jnp.bfloat16),
                     preferred_element_type=jnp.float32) + params["fc_b"]
    return feat, logits


def init_params(key):
    def conv_init(k, cin, cout):
        k1, k2 = jax.random.split(k)
        scale = 1.0 / float(np.sqrt(3 * 3 * cin))
        w = jax.random.normal(k1, (3, 3, cin, cout), jnp.float32) * scale
        b = jax.random.normal(k2, (cout,), jnp.float32) * 0.05
        return w, b

    k1, k2, k3, k4, k5 = jax.random.split(key, 5)
    features = [
        conv_init(k1, 3, 16),    # 8x8 -> pool -> 4x4
        conv_init(k2, 16, 32),   # 4x4 -> pool -> 2x2
        conv_init(k3, 32, 32),   # 2x2 -> pool -> 1x1  => n_channel = 32
    ]
    fc_w = jax.random.normal(k4, (_NUM_CLASSES, _N_CHANNEL), jnp.float32) * (
        1.0 / np.sqrt(_N_CHANNEL))
    fc_b = jax.random.normal(k5, (_NUM_CLASSES,), jnp.float32) * 0.05
    return {"features": features, "fc_w": fc_w, "fc_b": fc_b}


if __name__ == "__main__":
    key = jax.random.PRNGKey(0)
    kx, kp = jax.random.split(key)
    # PyTorch-style NCHW input: batch=2, channels=3, 8x8 spatial.
    x = jax.random.normal(kx, (2, 3, 8, 8), jnp.float32)
    params = init_params(kp)

    feat, logits = svhn_forward(x, params)
    jax.block_until_ready((feat, logits))

    assert feat.shape == (2, _N_CHANNEL), feat.shape
    assert logits.shape == (2, _NUM_CLASSES), logits.shape

    # 1) Structural check vs. a reference that uses the same bf16-operand /
    #    f32-accumulation arithmetic as the kernel (differences ~ f32 sum order).
    mf, ml = reference_bf16_matched(x, params)
    np.testing.assert_allclose(np.asarray(feat), np.asarray(mf), rtol=2e-3, atol=2e-3)
    np.testing.assert_allclose(np.asarray(logits), np.asarray(ml), rtol=2e-3, atol=2e-3)

    # 2) Accuracy check vs. the pure-f32 module forward (bf16 rounding budget).
    rf, rl = reference_f32(x, params)
    np.testing.assert_allclose(np.asarray(feat), np.asarray(rf), rtol=5e-2, atol=5e-2)
    np.testing.assert_allclose(np.asarray(logits), np.asarray(rl), rtol=5e-2, atol=5e-2)

    print("KERNEL_OK")
</pallas_src>

<mosaic_0001>
module attributes {stable_mosaic.version = 11 : i64} {
  func.func @_kernel(%arg0: i32, %arg1: memref<1x64x3xf32, #tpu.memory_space<vmem>>, %arg2: memref<27x16xbf16, #tpu.memory_space<vmem>>, %arg3: memref<1x16xf32, #tpu.memory_space<vmem>>, %arg4: memref<144x32xbf16, #tpu.memory_space<vmem>>, %arg5: memref<1x32xf32, #tpu.memory_space<vmem>>, %arg6: memref<288x32xbf16, #tpu.memory_space<vmem>>, %arg7: memref<1x32xf32, #tpu.memory_space<vmem>>, %arg8: memref<32x10xbf16, #tpu.memory_space<vmem>>, %arg9: memref<1x10xf32, #tpu.memory_space<vmem>>, %arg10: memref<1x1x32xf32, #tpu.memory_space<vmem>>, %arg11: memref<1x1x10xf32, #tpu.memory_space<vmem>>, %arg12: memref<208x3xf32, #tpu.memory_space<vmem>>, %arg13: memref<80x16xf32, #tpu.memory_space<vmem>>, %arg14: memref<64x32xf32, #tpu.memory_space<vmem>>) attributes {dimension_semantics = [#tpu.dimension_semantics<parallel>], iteration_bounds = array<i64: 2>, scalar_prefetch = 0 : i64, scratch_operands = 3 : i64, tpu.core_type = #tpu.core_type<tc>, window_params = [{transform_indices = @transform_0, window_bounds = array<i64: 1, 64, 3>}, {pipeline_mode = #tpu.pipeline_mode<synchronous>, transform_indices = @transform_1, window_bounds = array<i64: 27, 16>}, {pipeline_mode = #tpu.pipeline_mode<synchronous>, transform_indices = @transform_2, window_bounds = array<i64: 1, 16>}, {pipeline_mode = #tpu.pipeline_mode<synchronous>, transform_indices = @transform_3, window_bounds = array<i64: 144, 32>}, {pipeline_mode = #tpu.pipeline_mode<synchronous>, transform_indices = @transform_4, window_bounds = array<i64: 1, 32>}, {pipeline_mode = #tpu.pipeline_mode<synchronous>, transform_indices = @transform_5, window_bounds = array<i64: 288, 32>}, {pipeline_mode = #tpu.pipeline_mode<synchronous>, transform_indices = @transform_6, window_bounds = array<i64: 1, 32>}, {pipeline_mode = #tpu.pipeline_mode<synchronous>, transform_indices = @transform_7, window_bounds = array<i64: 32, 10>}, {pipeline_mode = #tpu.pipeline_mode<synchronous>, transform_indices = @transform_8, window_bounds = array<i64: 1, 10>}, {transform_indices = @transform_9, window_bounds = array<i64: 1, 1, 32>}, {transform_indices = @transform_10, window_bounds = array<i64: 1, 1, 10>}]} {
    %cst = arith.constant 0.000000e+00 : f32
    %0 = vector.broadcast %cst : f32 to vector<208x3xf32>
    %c0 = arith.constant 0 : index
    %c0_0 = arith.constant 0 : index
    %1 = vector.load %arg12[%c0, %c0_0] : memref<208x3xf32, #tpu.memory_space<vmem>>, vector<208x3xf32>
    tpu.vector_store %arg12[%c0, %c0_0], %0 {strides = array<i32>} : memref<208x3xf32, #tpu.memory_space<vmem>>, vector<208x3xf32>,
    %cst_1 = arith.constant 0.000000e+00 : f32
    %2 = vector.broadcast %cst_1 : f32 to vector<80x16xf32>
    %c0_2 = arith.constant 0 : index
    %c0_3 = arith.constant 0 : index
    %3 = vector.load %arg13[%c0_2, %c0_3] : memref<80x16xf32, #tpu.memory_space<vmem>>, vector<80x16xf32>
    tpu.vector_store %arg13[%c0_2, %c0_3], %2 {strides = array<i32>} : memref<80x16xf32, #tpu.memory_space<vmem>>, vector<80x16xf32>,
    %cst_4 = arith.constant 0.000000e+00 : f32
    %4 = vector.broadcast %cst_4 : f32 to vector<64x32xf32>
    %c0_5 = arith.constant 0 : index
    %c0_6 = arith.constant 0 : index
    %5 = vector.load %arg14[%c0_5, %c0_6] : memref<64x32xf32, #tpu.memory_space<vmem>>, vector<64x32xf32>
    tpu.vector_store %arg14[%c0_5, %c0_6], %4 {strides = array<i32>} : memref<64x32xf32, #tpu.memory_space<vmem>>, vector<64x32xf32>,
    %c0_7 = arith.constant 0 : index
    %c0_8 = arith.constant 0 : index
    %c0_9 = arith.constant 0 : index
    %6 = vector.load %arg1[%c0_7, %c0_8, %c0_9] : memref<1x64x3xf32, #tpu.memory_space<vmem>>, vector<1x8x3xf32>
    %7 = vector.shape_cast %6 : vector<1x8x3xf32> to vector<8x3xf32>
    %c41 = arith.constant 41 : index
    %c0_10 = arith.constant 0 : index
    %8 = vector.load %arg12[%c41, %c0_10] : memref<208x3xf32, #tpu.memory_space<vmem>>, vector<8x3xf32>
    tpu.vector_store %arg12[%c41, %c0_10], %7 {strides = array<i32>} : memref<208x3xf32, #tpu.memory_space<vmem>>, vector<8x3xf32>,
    %c0_11 = arith.constant 0 : index
    %c8 = arith.constant 8 : index
    %c0_12 = arith.constant 0 : index
    %9 = vector.load %arg1[%c0_11, %c8, %c0_12] : memref<1x64x3xf32, #tpu.memory_space<vmem>>, vector<1x8x3xf32>
    %10 = vector.shape_cast %9 : vector<1x8x3xf32> to vector<8x3xf32>
    %c57 = arith.constant 57 : index
    %c0_13 = arith.constant 0 : index
    %11 = vector.load %arg12[%c57, %c0_13] : memref<208x3xf32, #tpu.memory_space<vmem>>, vector<8x3xf32>
    tpu.vector_store %arg12[%c57, %c0_13], %10 {strides = array<i32>} : memref<208x3xf32, #tpu.memory_space<vmem>>, vector<8x3xf32>,
    %c0_14 = arith.constant 0 : index
    %c16 = arith.constant 16 : index
    %c0_15 = arith.constant 0 : index
    %12 = vector.load %arg1[%c0_14, %c16, %c0_15] : memref<1x64x3xf32, #tpu.memory_space<vmem>>, vector<1x8x3xf32>
    %13 = vector.shape_cast %12 : vector<1x8x3xf32> to vector<8x3xf32>
    %c73 = arith.constant 73 : index
    %c0_16 = arith.constant 0 : index
    %14 = vector.load %arg12[%c73, %c0_16] : memref<208x3xf32, #tpu.memory_space<vmem>>, vector<8x3xf32>
    tpu.vector_store %arg12[%c73, %c0_16], %13 {strides = array<i32>} : memref<208x3xf32, #tpu.memory_space<vmem>>, vector<8x3xf32>,
    %c0_17 = arith.constant 0 : index
    %c24 = arith.constant 24 : index
    %c0_18 = arith.constant 0 : index
    %15 = vector.load %arg1[%c0_17, %c24, %c0_18] : memref<1x64x3xf32, #tpu.memory_space<vmem>>, vector<1x8x3xf32>
    %16 = vector.shape_cast %15 : vector<1x8x3xf32> to vector<8x3xf32>
    %c89 = arith.constant 89 : index
    %c0_19 = arith.constant 0 : index
    %17 = vector.load %arg12[%c89, %c0_19] : memref<208x3xf32, #tpu.memory_space<vmem>>, vector<8x3xf32>
    tpu.vector_store %arg12[%c89, %c0_19], %16 {strides = array<i32>} : memref<208x3xf32, #tpu.memory_space<vmem>>, vector<8x3xf32>,
    %c0_20 = arith.constant 0 : index
    %c32 = arith.constant 32 : index
    %c0_21 = arith.constant 0 : index
    %18 = vector.load %arg1[%c0_20, %c32, %c0_21] : memref<1x64x3xf32, #tpu.memory_space<vmem>>, vector<1x8x3xf32>
    %19 = vector.shape_cast %18 : vector<1x8x3xf32> to vector<8x3xf32>
    %c105 = arith.constant 105 : index
    %c0_22 = arith.constant 0 : index
    %20 = vector.load %arg12[%c105, %c0_22] : memref<208x3xf32, #tpu.memory_space<vmem>>, vector<8x3xf32>
    tpu.vector_store %arg12[%c105, %c0_22], %19 {strides = array<i32>} : memref<208x3xf32, #tpu.memory_space<vmem>>, vector<8x3xf32>,
    %c0_23 = arith.constant 0 : index
    %c40 = arith.constant 40 : index
    %c0_24 = arith.constant 0 : index
    %21 = vector.load %arg1[%c0_23, %c40, %c0_24] : memref<1x64x3xf32, #tpu.memory_space<vmem>>, vector<1x8x3xf32>
    %22 = vector.shape_cast %21 : vector<1x8x3xf32> to vector<8x3xf32>
    %c121 = arith.constant 121 : index
    %c0_25 = arith.constant 0 : index
    %23 = vector.load %arg12[%c121, %c0_25] : memref<208x3xf32, #tpu.memory_space<vmem>>, vector<8x3xf32>
    tpu.vector_store %arg12[%c121, %c0_25], %22 {strides = array<i32>} : memref<208x3xf32, #tpu.memory_space<vmem>>, vector<8x3xf32>,
    %c0_26 = arith.constant 0 : index
    %c48 = arith.constant 48 : index
    %c0_27 = arith.constant 0 : index
    %24 = vector.load %arg1[%c0_26, %c48, %c0_27] : memref<1x64x3xf32, #tpu.memory_space<vmem>>, vector<1x8x3xf32>
    %25 = vector.shape_cast %24 : vector<1x8x3xf32> to vector<8x3xf32>
    %c137 = arith.constant 137 : index
    %c0_28 = arith.constant 0 : index
    %26 = vector.load %arg12[%c137, %c0_28] : memref<208x3xf32, #tpu.memory_space<vmem>>, vector<8x3xf32>
    tpu.vector_store %arg12[%c137, %c0_28], %25 {strides = array<i32>} : memref<208x3xf32, #tpu.memory_space<vmem>>, vector<8x3xf32>,
    %c0_29 = arith.constant 0 : index
    %c56 = arith.constant 56 : index
    %c0_30 = arith.constant 0 : index
    %27 = vector.load %arg1[%c0_29, %c56, %c0_30] : memref<1x64x3xf32, #tpu.memory_space<vmem>>, vector<1x8x3xf32>
    %28 = vector.shape_cast %27 : vector<1x8x3xf32> to vector<8x3xf32>
    %c153 = arith.constant 153 : index
    %c0_31 = arith.constant 0 : index
    %29 = vector.load %arg12[%c153, %c0_31] : memref<208x3xf32, #tpu.memory_space<vmem>>, vector<8x3xf32>
    tpu.vector_store %arg12[%c153, %c0_31], %28 {strides = array<i32>} : memref<208x3xf32, #tpu.memory_space<vmem>>, vector<8x3xf32>,
    %c7 = arith.constant 7 : index
    %c0_32 = arith.constant 0 : index
    %30 = vector.load %arg12[%c7, %c0_32] : memref<208x3xf32, #tpu.memory_space<vmem>>, vector<160x3xf32>
    %c8_33 = arith.constant 8 : index
    %c0_34 = arith.constant 0 : index
    %31 = vector.load %arg12[%c8_33, %c0_34] : memref<208x3xf32, #tpu.memory_space<vmem>>, vector<160x3xf32>
    %c9 = arith.constant 9 : index
    %c0_35 = arith.constant 0 : index
    %32 = vector.load %arg12[%c9, %c0_35] : memref<208x3xf32, #tpu.memory_space<vmem>>, vector<160x3xf32>
    %c23 = arith.constant 23 : index
    %c0_36 = arith.constant 0 : index
    %33 = vector.load %arg12[%c23, %c0_36] : memref<208x3xf32, #tpu.memory_space<vmem>>, vector<160x3xf32>
    %c24_37 = arith.constant 24 : index
    %c0_38 = arith.constant 0 : index
    %34 = vector.load %arg12[%c24_37, %c0_38] : memref<208x3xf32, #tpu.memory_space<vmem>>, vector<160x3xf32>
    %c25 = arith.constant 25 : index
    %c0_39 = arith.constant 0 : index
    %35 = vector.load %arg12[%c25, %c0_39] : memref<208x3xf32, #tpu.memory_space<vmem>>, vector<160x3xf32>
    %c39 = arith.constant 39 : index
    %c0_40 = arith.constant 0 : index
    %36 = vector.load %arg12[%c39, %c0_40] : memref<208x3xf32, #tpu.memory_space<vmem>>, vector<160x3xf32>
    %c40_41 = arith.constant 40 : index
    %c0_42 = arith.constant 0 : index
    %37 = vector.load %arg12[%c40_41, %c0_42] : memref<208x3xf32, #tpu.memory_space<vmem>>, vector<160x3xf32>
    %c41_43 = arith.constant 41 : index
    %c0_44 = arith.constant 0 : index
    %38 = vector.load %arg12[%c41_43, %c0_44] : memref<208x3xf32, #tpu.memory_space<vmem>>, vector<160x3xf32>
    %39 = tpu.concatenate %30, %31, %32, %33, %34, %35, %36, %37, %38 in 1 : vector<160x3xf32>, vector<160x3xf32>, vector<160x3xf32>, vector<160x3xf32>, vector<160x3xf32>, vector<160x3xf32>, vector<160x3xf32>, vector<160x3xf32>, vector<160x3xf32> -> vector<160x27xf32>
    %40 = arith.truncf %39 : vector<160x27xf32> to vector<160x27xbf16>
    %c0_45 = arith.constant 0 : index
    %c0_46 = arith.constant 0 : index
    %41 = vector.load %arg2[%c0_45, %c0_46] : memref<27x16xbf16, #tpu.memory_space<vmem>>, vector<27x16xbf16>
    %cst_47 = arith.constant dense<0.000000e+00> : vector<160x16xf32>
    %42 = tpu.matmul %40, %41, %cst_47 {dimension_numbers = #tpu.dot_dimension_numbers<[1], [0], [0], [1], [0, 0, 1, 1], [], []>} : vector<160x27xbf16>, vector<27x16xbf16>, vector<160x16xf32> -> vector<160x16xf32>
    %c0_48 = arith.constant 0 : index
    %c0_49 = arith.constant 0 : index
    %43 = vector.load %arg3[%c0_48, %c0_49] : memref<1x16xf32, #tpu.memory_space<vmem>>, vector<1x16xf32>
    %44 = vector.broadcast %43 : vector<1x16xf32> to vector<160x16xf32>
    %45 = arith.addf %42, %44 : vector<160x16xf32>
    %cst_50 = arith.constant 0.000000e+00 : f32
    %46 = vector.broadcast %cst_50 : f32 to vector<160x16xf32>
    %47 = arith.maximumf %45, %46 : vector<160x16xf32>
    %48 = vector.extract_strided_slice %47 {offsets = [0, 0], sizes = [143, 16], strides = [1, 1]} : vector<160x16xf32> to vector<143x16xf32>
    %49 = vector.extract_strided_slice %47 {offsets = [1, 0], sizes = [143, 16], strides = [1, 1]} : vector<160x16xf32> to vector<143x16xf32>
    %50 = arith.maximumf %48, %49 : vector<143x16xf32>
    %51 = vector.extract_strided_slice %47 {offsets = [16, 0], sizes = [143, 16], strides = [1, 1]} : vector<160x16xf32> to vector<143x16xf32>
    %52 = vector.extract_strided_slice %47 {offsets = [17, 0], sizes = [143, 16], strides = [1, 1]} : vector<160x16xf32> to vector<143x16xf32>
    %53 = arith.maximumf %51, %52 : vector<143x16xf32>
    %54 = arith.maximumf %50, %53 : vector<143x16xf32>
    %55 = vector.extract_strided_slice %54 {offsets = [17, 0], sizes = [1, 16], strides = [1, 1]} : vector<143x16xf32> to vector<1x16xf32>
    %c25_51 = arith.constant 25 : index
    %c0_52 = arith.constant 0 : index
    %56 = vector.load %arg13[%c25_51, %c0_52] : memref<80x16xf32, #tpu.memory_space<vmem>>, vector<1x16xf32>
    tpu.vector_store %arg13[%c25_51, %c0_52], %55 {strides = array<i32>} : memref<80x16xf32, #tpu.memory_space<vmem>>, vector<1x16xf32>,
    %57 = vector.extract_strided_slice %54 {offsets = [19, 0], sizes = [1, 16], strides = [1, 1]} : vector<143x16xf32> to vector<1x16xf32>
    %c26 = arith.constant 26 : index
    %c0_53 = arith.constant 0 : index
    %58 = vector.load %arg13[%c26, %c0_53] : memref<80x16xf32, #tpu.memory_space<vmem>>, vector<1x16xf32>
    tpu.vector_store %arg13[%c26, %c0_53], %57 {strides = array<i32>} : memref<80x16xf32, #tpu.memory_space<vmem>>, vector<1x16xf32>,
    %59 = vector.extract_strided_slice %54 {offsets = [21, 0], sizes = [1, 16], strides = [1, 1]} : vector<143x16xf32> to vector<1x16xf32>
    %c27 = arith.constant 27 : index
    %c0_54 = arith.constant 0 : index
    %60 = vector.load %arg13[%c27, %c0_54] : memref<80x16xf32, #tpu.memory_space<vmem>>, vector<1x16xf32>
    tpu.vector_store %arg13[%c27, %c0_54], %59 {strides = array<i32>} : memref<80x16xf32, #tpu.memory_space<vmem>>, vector<1x16xf32>,
    %61 = vector.extract_strided_slice %54 {offsets = [23, 0], sizes = [1, 16], strides = [1, 1]} : vector<143x16xf32> to vector<1x16xf32>
    %c28 = arith.constant 28 : index
    %c0_55 = arith.constant 0 : index
    %62 = vector.load %arg13[%c28, %c0_55] : memref<80x16xf32, #tpu.memory_space<vmem>>, vector<1x16xf32>
    tpu.vector_store %arg13[%c28, %c0_55], %61 {strides = array<i32>} : memref<80x16xf32, #tpu.memory_space<vmem>>, vector<1x16xf32>,
    %63 = vector.extract_strided_slice %54 {offsets = [49, 0], sizes = [1, 16], strides = [1, 1]} : vector<143x16xf32> to vector<1x16xf32>
    %c33 = arith.constant 33 : index
    %c0_56 = arith.constant 0 : index
    %64 = vector.load %arg13[%c33, %c0_56] : memref<80x16xf32, #tpu.memory_space<vmem>>, vector<1x16xf32>
    tpu.vector_store %arg13[%c33, %c0_56], %63 {strides = array<i32>} : memref<80x16xf32, #tpu.memory_space<vmem>>, vector<1x16xf32>,
    %65 = vector.extract_strided_slice %54 {offsets = [51, 0], sizes = [1, 16], strides = [1, 1]} : vector<143x16xf32> to vector<1x16xf32>
    %c34 = arith.constant 34 : index
    %c0_57 = arith.constant 0 : index
    %66 = vector.load %arg13[%c34, %c0_57] : memref<80x16xf32, #tpu.memory_space<vmem>>, vector<1x16xf32>
    tpu.vector_store %arg13[%c34, %c0_57], %65 {strides = array<i32>} : memref<80x16xf32, #tpu.memory_space<vmem>>, vector<1x16xf32>,
    %67 = vector.extract_strided_slice %54 {offsets = [53, 0], sizes = [1, 16], strides = [1, 1]} : vector<143x16xf32> to vector<1x16xf32>
    %c35 = arith.constant 35 : index
    %c0_58 = arith.constant 0 : index
    %68 = vector.load %arg13[%c35, %c0_58] : memref<80x16xf32, #tpu.memory_space<vmem>>, vector<1x16xf32>
    tpu.vector_store %arg13[%c35, %c0_58], %67 {strides = array<i32>} : memref<80x16xf32, #tpu.memory_space<vmem>>, vector<1x16xf32>,
    %69 = vector.extract_strided_slice %54 {offsets = [55, 0], sizes = [1, 16], strides = [1, 1]} : vector<143x16xf32> to vector<1x16xf32>
    %c36 = arith.constant 36 : index
    %c0_59 = arith.constant 0 : index
    %70 = vector.load %arg13[%c36, %c0_59] : memref<80x16xf32, #tpu.memory_space<vmem>>, vector<1x16xf32>
    tpu.vector_store %arg13[%c36, %c0_59], %69 {strides = array<i32>} : memref<80x16xf32, #tpu.memory_space<vmem>>, vector<1x16xf32>,
    %71 = vector.extract_strided_slice %54 {offsets = [81, 0], sizes = [1, 16], strides = [1, 1]} : vector<143x16xf32> to vector<1x16xf32>
    %c41_60 = arith.constant 41 : index
    %c0_61 = arith.constant 0 : index
    %72 = vector.load %arg13[%c41_60, %c0_61] : memref<80x16xf32, #tpu.memory_space<vmem>>, vector<1x16xf32>
    tpu.vector_store %arg13[%c41_60, %c0_61], %71 {strides = array<i32>} : memref<80x16xf32, #tpu.memory_space<vmem>>, vector<1x16xf32>,
    %73 = vector.extract_strided_slice %54 {offsets = [83, 0], sizes = [1, 16], strides = [1, 1]} : vector<143x16xf32> to vector<1x16xf32>
    %c42 = arith.constant 42 : index
    %c0_62 = arith.constant 0 : index
    %74 = vector.load %arg13[%c42, %c0_62] : memref<80x16xf32, #tpu.memory_space<vmem>>, vector<1x16xf32>
    tpu.vector_store %arg13[%c42, %c0_62], %73 {strides = array<i32>} : memref<80x16xf32, #tpu.memory_space<vmem>>, vector<1x16xf32>,
    %75 = vector.extract_strided_slice %54 {offsets = [85, 0], sizes = [1, 16], strides = [1, 1]} : vector<143x16xf32> to vector<1x16xf32>
    %c43 = arith.constant 43 : index
    %c0_63 = arith.constant 0 : index
    %76 = vector.load %arg13[%c43, %c0_63] : memref<80x16xf32, #tpu.memory_space<vmem>>, vector<1x16xf32>
    tpu.vector_store %arg13[%c43, %c0_63], %75 {strides = array<i32>} : memref<80x16xf32, #tpu.memory_space<vmem>>, vector<1x16xf32>,
    %77 = vector.extract_strided_slice %54 {offsets = [87, 0], sizes = [1, 16], strides = [1, 1]} : vector<143x16xf32> to vector<1x16xf32>
    %c44 = arith.constant 44 : index
    %c0_64 = arith.constant 0 : index
    %78 = vector.load %arg13[%c44, %c0_64] : memref<80x16xf32, #tpu.memory_space<vmem>>, vector<1x16xf32>
    tpu.vector_store %arg13[%c44, %c0_64], %77 {strides = array<i32>} : memref<80x16xf32, #tpu.memory_space<vmem>>, vector<1x16xf32>,
    %79 = vector.extract_strided_slice %54 {offsets = [113, 0], sizes = [1, 16], strides = [1, 1]} : vector<143x16xf32> to vector<1x16xf32>
    %c49 = arith.constant 49 : index
    %c0_65 = arith.constant 0 : index
    %80 = vector.load %arg13[%c49, %c0_65] : memref<80x16xf32, #tpu.memory_space<vmem>>, vector<1x16xf32>
    tpu.vector_store %arg13[%c49, %c0_65], %79 {strides = array<i32>} : memref<80x16xf32, #tpu.memory_space<vmem>>, vector<1x16xf32>,
    %81 = vector.extract_strided_slice %54 {offsets = [115, 0], sizes = [1, 16], strides = [1, 1]} : vector<143x16xf32> to vector<1x16xf32>
    %c50 = arith.constant 50 : index
    %c0_66 = arith.constant 0 : index
    %82 = vector.load %arg13[%c50, %c0_66] : memref<80x16xf32, #tpu.memory_space<vmem>>, vector<1x16xf32>
    tpu.vector_store %arg13[%c50, %c0_66], %81 {strides = array<i32>} : memref<80x16xf32, #tpu.memory_space<vmem>>, vector<1x16xf32>,
    %83 = vector.extract_strided_slice %54 {offsets = [117, 0], sizes = [1, 16], strides = [1, 1]} : vector<143x16xf32> to vector<1x16xf32>
    %c51 = arith.constant 51 : index
    %c0_67 = arith.constant 0 : index
    %84 = vector.load %arg13[%c51, %c0_67] : memref<80x16xf32, #tpu.memory_space<vmem>>, vector<1x16xf32>
    tpu.vector_store %arg13[%c51, %c0_67], %83 {strides = array<i32>} : memref<80x16xf32, #tpu.memory_space<vmem>>, vector<1x16xf32>,
    %85 = vector.extract_strided_slice %54 {offsets = [119, 0], sizes = [1, 16], strides = [1, 1]} : vector<143x16xf32> to vector<1x16xf32>
    %c52 = arith.constant 52 : index
    %c0_68 = arith.constant 0 : index
    %86 = vector.load %arg13[%c52, %c0_68] : memref<80x16xf32, #tpu.memory_space<vmem>>, vector<1x16xf32>
    tpu.vector_store %arg13[%c52, %c0_68], %85 {strides = array<i32>} : memref<80x16xf32, #tpu.memory_space<vmem>>, vector<1x16xf32>,
    %c7_69 = arith.constant 7 : index
    %c0_70 = arith.constant 0 : index
    %87 = vector.load %arg13[%c7_69, %c0_70] : memref<80x16xf32, #tpu.memory_space<vmem>>, vector<48x16xf32>
    %c8_71 = arith.constant 8 : index
    %c0_72 = arith.constant 0 : index
    %88 = vector.load %arg13[%c8_71, %c0_72] : memref<80x16xf32, #tpu.memory_space<vmem>>, vector<48x16xf32>
    %c9_73 = arith.constant 9 : index
    %c0_74 = arith.constant 0 : index
    %89 = vector.load %arg13[%c9_73, %c0_74] : memref<80x16xf32, #tpu.memory_space<vmem>>, vector<48x16xf32>
    %c15 = arith.constant 15 : index
    %c0_75 = arith.constant 0 : index
    %90 = vector.load %arg13[%c15, %c0_75] : memref<80x16xf32, #tpu.memory_space<vmem>>, vector<48x16xf32>
    %c16_76 = arith.constant 16 : index
    %c0_77 = arith.constant 0 : index
    %91 = vector.load %arg13[%c16_76, %c0_77] : memref<80x16xf32, #tpu.memory_space<vmem>>, vector<48x16xf32>
    %c17 = arith.constant 17 : index
    %c0_78 = arith.constant 0 : index
    %92 = vector.load %arg13[%c17, %c0_78] : memref<80x16xf32, #tpu.memory_space<vmem>>, vector<48x16xf32>
    %c23_79 = arith.constant 23 : index
    %c0_80 = arith.constant 0 : index
    %93 = vector.load %arg13[%c23_79, %c0_80] : memref<80x16xf32, #tpu.memory_space<vmem>>, vector<48x16xf32>
    %c24_81 = arith.constant 24 : index
    %c0_82 = arith.constant 0 : index
    %94 = vector.load %arg13[%c24_81, %c0_82] : memref<80x16xf32, #tpu.memory_space<vmem>>, vector<48x16xf32>
    %c25_83 = arith.constant 25 : index
    %c0_84 = arith.constant 0 : index
    %95 = vector.load %arg13[%c25_83, %c0_84] : memref<80x16xf32, #tpu.memory_space<vmem>>, vector<48x16xf32>
    %96 = tpu.concatenate %87, %88, %89, %90, %91, %92, %93, %94, %95 in 1 : vector<48x16xf32>, vector<48x16xf32>, vector<48x16xf32>, vector<48x16xf32>, vector<48x16xf32>, vector<48x16xf32>, vector<48x16xf32>, vector<48x16xf32>, vector<48x16xf32> -> vector<48x144xf32>
    %97 = arith.truncf %96 : vector<48x144xf32> to vector<48x144xbf16>
    %c0_85 = arith.constant 0 : index
    %c0_86 = arith.constant 0 : index
    %98 = vector.load %arg4[%c0_85, %c0_86] : memref<144x32xbf16, #tpu.memory_space<vmem>>, vector<144x32xbf16>
    %cst_87 = arith.constant dense<0.000000e+00> : vector<48x32xf32>
    %99 = tpu.matmul %97, %98, %cst_87 {dimension_numbers = #tpu.dot_dimension_numbers<[1], [0], [0], [1], [0, 0, 1, 1], [], []>} : vector<48x144xbf16>, vector<144x32xbf16>, vector<48x32xf32> -> vector<48x32xf32>
    %c0_88 = arith.constant 0 : index
    %c0_89 = arith.constant 0 : index
    %100 = vector.load %arg5[%c0_88, %c0_89] : memref<1x32xf32, #tpu.memory_space<vmem>>, vector<1x32xf32>
    %101 = vector.broadcast %100 : vector<1x32xf32> to vector<48x32xf32>
    %102 = arith.addf %99, %101 : vector<48x32xf32>
    %cst_90 = arith.constant 0.000000e+00 : f32
    %103 = vector.broadcast %cst_90 : f32 to vector<48x32xf32>
    %104 = arith.maximumf %102, %103 : vector<48x32xf32>
    %105 = vector.extract_strided_slice %104 {offsets = [0, 0], sizes = [39, 32], strides = [1, 1]} : vector<48x32xf32> to vector<39x32xf32>
    %106 = vector.extract_strided_slice %104 {offsets = [1, 0], sizes = [39, 32], strides = [1, 1]} : vector<48x32xf32> to vector<39x32xf32>
    %107 = arith.maximumf %105, %106 : vector<39x32xf32>
    %108 = vector.extract_strided_slice %104 {offsets = [8, 0], sizes = [39, 32], strides = [1, 1]} : vector<48x32xf32> to vector<39x32xf32>
    %109 = vector.extract_strided_slice %104 {offsets = [9, 0], sizes = [39, 32], strides = [1, 1]} : vector<48x32xf32> to vector<39x32xf32>
    %110 = arith.maximumf %108, %109 : vector<39x32xf32>
    %111 = arith.maximumf %107, %110 : vector<39x32xf32>
    %112 = vector.extract_strided_slice %111 {offsets = [9, 0], sizes = [1, 32], strides = [1, 1]} : vector<39x32xf32> to vector<1x32xf32>
    %c25_91 = arith.constant 25 : index
    %c0_92 = arith.constant 0 : index
    %113 = vector.load %arg14[%c25_91, %c0_92] : memref<64x32xf32, #tpu.memory_space<vmem>>, vector<1x32xf32>
    tpu.vector_store %arg14[%c25_91, %c0_92], %112 {strides = array<i32>} : memref<64x32xf32, #tpu.memory_space<vmem>>, vector<1x32xf32>,
    %114 = vector.extract_strided_slice %111 {offsets = [11, 0], sizes = [1, 32], strides = [1, 1]} : vector<39x32xf32> to vector<1x32xf32>
    %c26_93 = arith.constant 26 : index
    %c0_94 = arith.constant 0 : index
    %115 = vector.load %arg14[%c26_93, %c0_94] : memref<64x32xf32, #tpu.memory_space<vmem>>, vector<1x32xf32>
    tpu.vector_store %arg14[%c26_93, %c0_94], %114 {strides = array<i32>} : memref<64x32xf32, #tpu.memory_space<vmem>>, vector<1x32xf32>,
    %116 = vector.extract_strided_slice %111 {offsets = [25, 0], sizes = [1, 32], strides = [1, 1]} : vector<39x32xf32> to vector<1x32xf32>
    %c33_95 = arith.constant 33 : index
    %c0_96 = arith.constant 0 : index
    %117 = vector.load %arg14[%c33_95, %c0_96] : memref<64x32xf32, #tpu.memory_space<vmem>>, vector<1x32xf32>
    tpu.vector_store %arg14[%c33_95, %c0_96], %116 {strides = array<i32>} : memref<64x32xf32, #tpu.memory_space<vmem>>, vector<1x32xf32>,
    %118 = vector.extract_strided_slice %111 {offsets = [27, 0], sizes = [1, 32], strides = [1, 1]} : vector<39x32xf32> to vector<1x32xf32>
    %c34_97 = arith.constant 34 : index
    %c0_98 = arith.constant 0 : index
    %119 = vector.load %arg14[%c34_97, %c0_98] : memref<64x32xf32, #tpu.memory_space<vmem>>, vector<1x32xf32>
    tpu.vector_store %arg14[%c34_97, %c0_98], %118 {strides = array<i32>} : memref<64x32xf32, #tpu.memory_space<vmem>>, vector<1x32xf32>,
    %c7_99 = arith.constant 7 : index
    %c0_100 = arith.constant 0 : index
    %120 = vector.load %arg14[%c7_99, %c0_100] : memref<64x32xf32, #tpu.memory_space<vmem>>, vector<32x32xf32>
    %c8_101 = arith.constant 8 : index
    %c0_102 = arith.constant 0 : index
    %121 = vector.load %arg14[%c8_101, %c0_102] : memref<64x32xf32, #tpu.memory_space<vmem>>, vector<32x32xf32>
    %c9_103 = arith.constant 9 : index
    %c0_104 = arith.constant 0 : index
    %122 = vector.load %arg14[%c9_103, %c0_104] : memref<64x32xf32, #tpu.memory_space<vmem>>, vector<32x32xf32>
    %c15_105 = arith.constant 15 : index
    %c0_106 = arith.constant 0 : index
    %123 = vector.load %arg14[%c15_105, %c0_106] : memref<64x32xf32, #tpu.memory_space<vmem>>, vector<32x32xf32>
    %c16_107 = arith.constant 16 : index
    %c0_108 = arith.constant 0 : index
    %124 = vector.load %arg14[%c16_107, %c0_108] : memref<64x32xf32, #tpu.memory_space<vmem>>, vector<32x32xf32>
    %c17_109 = arith.constant 17 : index
    %c0_110 = arith.constant 0 : index
    %125 = vector.load %arg14[%c17_109, %c0_110] : memref<64x32xf32, #tpu.memory_space<vmem>>, vector<32x32xf32>
    %c23_111 = arith.constant 23 : index
    %c0_112 = arith.constant 0 : index
    %126 = vector.load %arg14[%c23_111, %c0_112] : memref<64x32xf32, #tpu.memory_space<vmem>>, vector<32x32xf32>
    %c24_113 = arith.constant 24 : index
    %c0_114 = arith.constant 0 : index
    %127 = vector.load %arg14[%c24_113, %c0_114] : memref<64x32xf32, #tpu.memory_space<vmem>>, vector<32x32xf32>
    %c25_115 = arith.constant 25 : index
    %c0_116 = arith.constant 0 : index
    %128 = vector.load %arg14[%c25_115, %c0_116] : memref<64x32xf32, #tpu.memory_space<vmem>>, vector<32x32xf32>
    %129 = tpu.concatenate %120, %121, %122, %123, %124, %125, %126, %127, %128 in 1 : vector<32x32xf32>, vector<32x32xf32>, vector<32x32xf32>, vector<32x32xf32>, vector<32x32xf32>, vector<32x32xf32>, vector<32x32xf32>, vector<32x32xf32>, vector<32x32xf32> -> vector<32x288xf32>
    %130 = arith.truncf %129 : vector<32x288xf32> to vector<32x288xbf16>
    %c0_117 = arith.constant 0 : index
    %c0_118 = arith.constant 0 : index
    %131 = vector.load %arg6[%c0_117, %c0_118] : memref<288x32xbf16, #tpu.memory_space<vmem>>, vector<288x32xbf16>
    %cst_119 = arith.constant dense<0.000000e+00> : vector<32x32xf32>
    %132 = tpu.matmul %130, %131, %cst_119 {dimension_numbers = #tpu.dot_dimension_numbers<[1], [0], [0], [1], [0, 0, 1, 1], [], []>} : vector<32x288xbf16>, vector<288x32xbf16>, vector<32x32xf32> -> vector<32x32xf32>
    %c0_120 = arith.constant 0 : index
    %c0_121 = arith.constant 0 : index
    %133 = vector.load %arg7[%c0_120, %c0_121] : memref<1x32xf32, #tpu.memory_space<vmem>>, vector<1x32xf32>
    %134 = vector.broadcast %133 : vector<1x32xf32> to vector<32x32xf32>
    %135 = arith.addf %132, %134 : vector<32x32xf32>
    %cst_122 = arith.constant 0.000000e+00 : f32
    %136 = vector.broadcast %cst_122 : f32 to vector<32x32xf32>
    %137 = arith.maximumf %135, %136 : vector<32x32xf32>
    %138 = vector.extract_strided_slice %137 {offsets = [0, 0], sizes = [23, 32], strides = [1, 1]} : vector<32x32xf32> to vector<23x32xf32>
    %139 = vector.extract_strided_slice %137 {offsets = [1, 0], sizes = [23, 32], strides = [1, 1]} : vector<32x32xf32> to vector<23x32xf32>
    %140 = arith.maximumf %138, %139 : vector<23x32xf32>
    %141 = vector.extract_strided_slice %137 {offsets = [8, 0], sizes = [23, 32], strides = [1, 1]} : vector<32x32xf32> to vector<23x32xf32>
    %142 = vector.extract_strided_slice %137 {offsets = [9, 0], sizes = [23, 32], strides = [1, 1]} : vector<32x32xf32> to vector<23x32xf32>
    %143 = arith.maximumf %141, %142 : vector<23x32xf32>
    %144 = arith.maximumf %140, %143 : vector<23x32xf32>
    %145 = vector.extract_strided_slice %144 {offsets = [9, 0], sizes = [1, 32], strides = [1, 1]} : vector<23x32xf32> to vector<1x32xf32>
    %c0_123 = arith.constant 0 : index
    %c0_124 = arith.constant 0 : index
    %c0_125 = arith.constant 0 : index
    %146 = vector.load %arg10[%c0_123, %c0_124, %c0_125] : memref<1x1x32xf32, #tpu.memory_space<vmem>>, vector<1x1x32xf32>
    %147 = vector.shape_cast %146 : vector<1x1x32xf32> to vector<1x32xf32>
    %148 = vector.shape_cast %145 : vector<1x32xf32> to vector<1x1x32xf32>
    tpu.vector_store %arg10[%c0_123, %c0_124, %c0_125], %148 {strides = array<i32>} : memref<1x1x32xf32, #tpu.memory_space<vmem>>, vector<1x1x32xf32>,
    %149 = arith.truncf %145 : vector<1x32xf32> to vector<1x32xbf16>
    %c0_126 = arith.constant 0 : index
    %c0_127 = arith.constant 0 : index
    %150 = vector.load %arg8[%c0_126, %c0_127] : memref<32x10xbf16, #tpu.memory_space<vmem>>, vector<32x10xbf16>
    %cst_128 = arith.constant dense<0.000000e+00> : vector<1x10xf32>
    %151 = tpu.matmul %149, %150, %cst_128 {dimension_numbers = #tpu.dot_dimension_numbers<[1], [0], [0], [1], [0, 0, 1, 1], [], []>} : vector<1x32xbf16>, vector<32x10xbf16>, vector<1x10xf32> -> vector<1x10xf32>
    %c0_129 = arith.constant 0 : index
    %c0_130 = arith.constant 0 : index
    %152 = vector.load %arg9[%c0_129, %c0_130] : memref<1x10xf32, #tpu.memory_space<vmem>>, vector<1x10xf32>
    %153 = arith.addf %151, %152 : vector<1x10xf32>
    %c0_131 = arith.constant 0 : index
    %c0_132 = arith.constant 0 : index
    %c0_133 = arith.constant 0 : index
    %154 = vector.load %arg11[%c0_131, %c0_132, %c0_133] : memref<1x1x10xf32, #tpu.memory_space<vmem>>, vector<1x1x10xf32>
    %155 = vector.shape_cast %154 : vector<1x1x10xf32> to vector<1x10xf32>
    %156 = vector.shape_cast %153 : vector<1x10xf32> to vector<1x1x10xf32>
    tpu.vector_store %arg11[%c0_131, %c0_132, %c0_133], %156 {strides = array<i32>} : memref<1x1x10xf32, #tpu.memory_space<vmem>>, vector<1x1x10xf32>,
    return
  }
  func.func @transform_0(%arg0: i32) -> (i32, i32, i32) {
    %c0_i32 = arith.constant 0 : i32
    %c0_i32_0 = arith.constant 0 : i32
    %c0_i32_1 = arith.constant 0 : i32
    return %arg0, %c0_i32, %c0_i32_0 : i32, i32, i32
  }
  func.func @transform_1(%arg0: i32) -> (i32, i32) {
    %c0_i32 = arith.constant 0 : i32
    %c0_i32_0 = arith.constant 0 : i32
    %c0_i32_1 = arith.constant 0 : i32
    return %c0_i32, %c0_i32_0 : i32, i32
  }
  func.func @transform_2(%arg0: i32) -> (i32, i32) {
    %c0_i32 = arith.constant 0 : i32
    %c0_i32_0 = arith.constant 0 : i32
    %c0_i32_1 = arith.constant 0 : i32
    return %c0_i32, %c0_i32_0 : i32, i32
  }
  func.func @transform_3(%arg0: i32) -> (i32, i32) {
    %c0_i32 = arith.constant 0 : i32
    %c0_i32_0 = arith.constant 0 : i32
    %c0_i32_1 = arith.constant 0 : i32
    return %c0_i32, %c0_i32_0 : i32, i32
  }
  func.func @transform_4(%arg0: i32) -> (i32, i32) {
    %c0_i32 = arith.constant 0 : i32
    %c0_i32_0 = arith.constant 0 : i32
    %c0_i32_1 = arith.constant 0 : i32
    return %c0_i32, %c0_i32_0 : i32, i32
  }
  func.func @transform_5(%arg0: i32) -> (i32, i32) {
    %c0_i32 = arith.constant 0 : i32
    %c0_i32_0 = arith.constant 0 : i32
    %c0_i32_1 = arith.constant 0 : i32
    return %c0_i32, %c0_i32_0 : i32, i32
  }
  func.func @transform_6(%arg0: i32) -> (i32, i32) {
    %c0_i32 = arith.constant 0 : i32
    %c0_i32_0 = arith.constant 0 : i32
    %c0_i32_1 = arith.constant 0 : i32
    return %c0_i32, %c0_i32_0 : i32, i32
  }
  func.func @transform_7(%arg0: i32) -> (i32, i32) {
    %c0_i32 = arith.constant 0 : i32
    %c0_i32_0 = arith.constant 0 : i32
    %c0_i32_1 = arith.constant 0 : i32
    return %c0_i32, %c0_i32_0 : i32, i32
  }
  func.func @transform_8(%arg0: i32) -> (i32, i32) {
    %c0_i32 = arith.constant 0 : i32
    %c0_i32_0 = arith.constant 0 : i32
    %c0_i32_1 = arith.constant 0 : i32
    return %c0_i32, %c0_i32_0 : i32, i32
  }
  func.func @transform_9(%arg0: i32) -> (i32, i32, i32) {
    %c0_i32 = arith.constant 0 : i32
    %c0_i32_0 = arith.constant 0 : i32
    %c0_i32_1 = arith.constant 0 : i32
    return %arg0, %c0_i32, %c0_i32_0 : i32, i32, i32
  }
  func.func @transform_10(%arg0: i32) -> (i32, i32, i32) {
    %c0_i32 = arith.constant 0 : i32
    %c0_i32_0 = arith.constant 0 : i32
    %c0_i32_1 = arith.constant 0 : i32
    return %arg0, %c0_i32, %c0_i32_0 : i32, i32, i32
  }
}

</mosaic_0001>

<llo_original>
// kernel: svhn_forward.1
$region0: #{svhn_forward.1}
  #allocation0 [shape = 'u32[]', space=smem, size = 0x4, offset = 0x4, fixed_abs, tag = 'smem constant byte address 0x4 - core index']
  #allocation1 [shape = 'u32[144,128]{1,0:T(1,128)}', space=vmem, size = 0x12000, scoped, tag = 'internal scratch']
  #allocation2 [shape = 'f32[208,3]{1,0:T(8,128)}', space=vmem, size = 0x1a000, scoped, tag = 'scratch operand']
  #allocation3 [shape = 'f32[80,16]{1,0:T(8,128)}', space=vmem, size = 0xa000, scoped, tag = 'scratch operand']
  #allocation4 [shape = 'f32[64,32]{1,0:T(8,128)}', space=vmem, size = 0x8000, scoped, tag = 'scratch operand']
  %s0 = inlined_call_operand.vmem [shape: f32[2,64,3], index: 0, kind: input, shape index: {}]
  %s1 = inlined_call_operand.vmem [shape: bf16[27,16], index: 1, kind: input, shape index: {}]
  %s2 = inlined_call_operand.vmem [shape: f32[1,16], index: 2, kind: input, shape index: {}]
  %s3 = inlined_call_operand.vmem [shape: bf16[144,32], index: 3, kind: input, shape index: {}]
  %s4 = inlined_call_operand.vmem [shape: f32[1,32], index: 4, kind: input, shape index: {}]
  %s5 = inlined_call_operand.vmem [shape: bf16[288,32], index: 5, kind: input, shape index: {}]
  %s6 = inlined_call_operand.vmem [shape: f32[1,32], index: 6, kind: input, shape index: {}]
  %s7 = inlined_call_operand.vmem [shape: bf16[32,10], index: 7, kind: input, shape index: {}]
  %s8 = inlined_call_operand.vmem [shape: f32[1,10], index: 8, kind: input, shape index: {}]
  %s9 = inlined_call_operand.hbm [shape: f32[2,1,32], index: 9, kind: output, shape index: {0}]
  %s10 = inlined_call_operand.hbm [shape: f32[2,1,10], index: 10, kind: output, shape index: {1}]
  %11 = xla_tuple %s9, %s10
  %s12 = sld [smem:[#allocation0]]
  $region77: #{svhn_forward.1} parent=0
    _
  %s14 = ssub.s32 1, %s12
  %s15 = scalar_select 0, %s14, %s12
  $region1: #{svhn_forward.1} parent=0
    #allocation5 [shape = 'u8[1024]{0}', space=vmem, size = 0x400, scoped, tag = 'output window, operand 0']
    #allocation6 [shape = 's32[2]{0}', space=sflag, size = 0x8, scoped, tag = 'scoped memory for svhn_forward.1']
    #allocation7 [shape = 'u8[1024]{0}', space=vmem, size = 0x400, scoped, tag = 'output window, operand 1']
    #allocation8 [shape = 's32[2]{0}', space=sflag, size = 0x8, scoped, tag = 'scoped memory for svhn_forward.1']
    %16 = vsyncpa [#allocation6], 0
    %s17 = scalar_lea.sflag [#allocation6], 1
    %18 = vsyncpa %s17, 0
    %19 = vsyncpa [#allocation8], 0
    %s20 = scalar_lea.sflag [#allocation8], 1
    %21 = vsyncpa %s20, 0
    loop: start=0, step=1, limit=4
    $region2: #{svhn_forward.1} parent=1 // loop_pre_header
      _
    $region3: #{svhn_forward.1} parent=1 // loop_header
      %s23 = sphi 0, %s27
      %p24 = scmp.ge.s32.totalorder %s23, 4
      %s33 = sphi 0, %s35
      %s36 = sphi 0, %s33
      %s37 = sphi 0, %s36
      %s53 = sphi 0, %s37
      %s57 = sphi 0, %s57
      %s59 = sphi 0, %s57
      %s60 = sphi 0, %s59
      %s74 = sphi 0, %s60
      %s78 = sphi 0, %s78
      %s80 = sphi 0, %s78
      %s81 = sphi 0, %s80
      %s95 = sphi 0, %s81
      %s99 = sphi 0, %s99
      %s101 = sphi 0, %s99
      %s102 = sphi 0, %s101
      %s116 = sphi 0, %s102
      %s120 = sphi 0, %s120
      %s122 = sphi 0, %s120
      %s123 = sphi 0, %s122
      %s137 = sphi 0, %s123
      %s141 = sphi 0, %s141
      %s143 = sphi 0, %s141
      %s144 = sphi 0, %s143
      %s158 = sphi 0, %s144
      %s162 = sphi 0, %s162
      %s164 = sphi 0, %s162
      %s165 = sphi 0, %s164
      %s179 = sphi 0, %s165
      %s183 = sphi 0, %s183
      %s185 = sphi 0, %s183
      %s186 = sphi 0, %s185
      %s200 = sphi 0, %s186
      %s204 = sphi 0, %s204
      %s206 = sphi 0, %s204
      %s207 = sphi 0, %s206
      %s221 = sphi 0, %s207
      %s227 = sphi 0, %s229
      %s230 = sphi 0, %s227
      %s231 = sphi 0, %s230
      %s247 = sphi 0, %s231
      %s253 = sphi 0, %s255
      %s256 = sphi 0, %s253
      %s257 = sphi 0, %s256
      %s273 = sphi 0, %s257
    $region4: #{svhn_forward.1} parent=1 // loop_header_branch
      %26 = sbr.rel (%p24) target = $region8
    $region5: #{svhn_forward.1} parent=1 // loop_body
      %s28 = ssub.s32 %s23, 1
      %s29 = ssub.s32 %s23, 2
      %s30 = sadd.s32 %s23, 1
      %s31 = ssub.s32 %s23, %s30
      %p32 = scmp.eq.s32.totalorder %s31, 0
      %s34 = sadd.s32 %s33, 1
      %s35 = scalar_select %p32, %s33, %s34
      %p38 = pneg %p32
      %p39 = scmp.eq.s32.totalorder %s23, 1
      %p40 = por %p38, %p39
      %p41 = scmp.ne.s32.totalorder %s33, %s36
      %p42 = scmp.eq.s32.totalorder %s23, 0
      %p43 = por %p41, %p42
      %p44 = scmp.ne.s32.totalorder %s33, %s36
      %p45 = scmp.eq.s32.totalorder %s28, 1
      %p46 = por %p44, %p45
      %p47 = scmp.ne.s32.totalorder %s36, %s37
      %p48 = scmp.eq.s32.totalorder %s28, 0
      %p49 = por %p47, %p48
      %p50 = scmp.ne.s32.totalorder %s36, %s37
      %p51 = scmp.eq.s32.totalorder %s29, 1
      %p52 = por %p50, %p51
      %p54 = scmp.ne.s32.totalorder %s37, %s53
      %p55 = scmp.eq.s32.totalorder %s29, 0
      %p56 = por %p54, %p55
      %s58 = sadd.s32 %s57, 1
      %p61 = scmp.eq.s32.totalorder %s23, 1
      %p62 = scmp.ne.s32.totalorder %s57, %s59
      %p63 = scmp.eq.s32.totalorder %s23, 0
      %p64 = por %p62, %p63
      %p65 = scmp.ne.s32.totalorder %s57, %s59
      %p66 = scmp.eq.s32.totalorder %s28, 1
      %p67 = por %p65, %p66
      %p68 = scmp.ne.s32.totalorder %s59, %s60
      %p69 = scmp.eq.s32.totalorder %s28, 0
      %p70 = por %p68, %p69
      %p71 = scmp.ne.s32.totalorder %s59, %s60
      %p72 = scmp.eq.s32.totalorder %s29, 1
      %p73 = por %p71, %p72
      %p75 = scmp.ne.s32.totalorder %s60, %s74
      %p76 = scmp.eq.s32.totalorder %s29, 0
      %p77 = por %p75, %p76
      %s79 = sadd.s32 %s78, 1
      %p82 = scmp.eq.s32.totalorder %s23, 1
      %p83 = scmp.ne.s32.totalorder %s78, %s80
      %p84 = scmp.eq.s32.totalorder %s23, 0
      %p85 = por %p83, %p84
      %p86 = scmp.ne.s32.totalorder %s78, %s80
      %p87 = scmp.eq.s32.totalorder %s28, 1
      %p88 = por %p86, %p87
      %p89 = scmp.ne.s32.totalorder %s80, %s81
      %p90 = scmp.eq.s32.totalorder %s28, 0
      %p91 = por %p89, %p90
      %p92 = scmp.ne.s32.totalorder %s80, %s81
      %p93 = scmp.eq.s32.totalorder %s29, 1
      %p94 = por %p92, %p93
      %p96 = scmp.ne.s32.totalorder %s81, %s95
      %p97 = scmp.eq.s32.totalorder %s29, 0
      %p98 = por %p96, %p97
      %s100 = sadd.s32 %s99, 1
      %p103 = scmp.eq.s32.totalorder %s23, 1
      %p104 = scmp.ne.s32.totalorder %s99, %s101
      %p105 = scmp.eq.s32.totalorder %s23, 0
      %p106 = por %p104, %p105
      %p107 = scmp.ne.s32.totalorder %s99, %s101
      %p108 = scmp.eq.s32.totalorder %s28, 1
      %p109 = por %p107, %p108
      %p110 = scmp.ne.s32.totalorder %s101, %s102
      %p111 = scmp.eq.s32.totalorder %s28, 0
      %p112 = por %p110, %p111
      %p113 = scmp.ne.s32.totalorder %s101, %s102
      %p114 = scmp.eq.s32.totalorder %s29, 1
      %p115 = por %p113, %p114
      %p117 = scmp.ne.s32.totalorder %s102, %s116
      %p118 = scmp.eq.s32.totalorder %s29, 0
      %p119 = por %p117, %p118
      %s121 = sadd.s32 %s120, 1
      %p124 = scmp.eq.s32.totalorder %s23, 1
      %p125 = scmp.ne.s32.totalorder %s120, %s122
      %p126 = scmp.eq.s32.totalorder %s23, 0
      %p127 = por %p125, %p126
      %p128 = scmp.ne.s32.totalorder %s120, %s122
      %p129 = scmp.eq.s32.totalorder %s28, 1
      %p130 = por %p128, %p129
      %p131 = scmp.ne.s32.totalorder %s122, %s123
      %p132 = scmp.eq.s32.totalorder %s28, 0
      %p133 = por %p131, %p132
      %p134 = scmp.ne.s32.totalorder %s122, %s123
      %p135 = scmp.eq.s32.totalorder %s29, 1
      %p136 = por %p134, %p135
      %p138 = scmp.ne.s32.totalorder %s123, %s137
      %p139 = scmp.eq.s32.totalorder %s29, 0
      %p140 = por %p138, %p139
      %s142 = sadd.s32 %s141, 1
      %p145 = scmp.eq.s32.totalorder %s23, 1
      %p146 = scmp.ne.s32.totalorder %s141, %s143
      %p147 = scmp.eq.s32.totalorder %s23, 0
      %p148 = por %p146, %p147
      %p149 = scmp.ne.s32.totalorder %s141, %s143
      %p150 = scmp.eq.s32.totalorder %s28, 1
      %p151 = por %p149, %p150
      %p152 = scmp.ne.s32.totalorder %s143, %s144
      %p153 = scmp.eq.s32.totalorder %s28, 0
      %p154 = por %p152, %p153
      %p155 = scmp.ne.s32.totalorder %s143, %s144
      %p156 = scmp.eq.s32.totalorder %s29, 1
      %p157 = por %p155, %p156
      %p159 = scmp.ne.s32.totalorder %s144, %s158
      %p160 = scmp.eq.s32.totalorder %s29, 0
      %p161 = por %p159, %p160
      %s163 = sadd.s32 %s162, 1
      %p166 = scmp.eq.s32.totalorder %s23, 1
      %p167 = scmp.ne.s32.totalorder %s162, %s164
      %p168 = scmp.eq.s32.totalorder %s23, 0
      %p169 = por %p167, %p168
      %p170 = scmp.ne.s32.totalorder %s162, %s164
      %p171 = scmp.eq.s32.totalorder %s28, 1
      %p172 = por %p170, %p171
      %p173 = scmp.ne.s32.totalorder %s164, %s165
      %p174 = scmp.eq.s32.totalorder %s28, 0
      %p175 = por %p173, %p174
      %p176 = scmp.ne.s32.totalorder %s164, %s165
      %p177 = scmp.eq.s32.totalorder %s29, 1
      %p178 = por %p176, %p177
      %p180 = scmp.ne.s32.totalorder %s165, %s179
      %p181 = scmp.eq.s32.totalorder %s29, 0
      %p182 = por %p180, %p181
      %s184 = sadd.s32 %s183, 1
      %p187 = scmp.eq.s32.totalorder %s23, 1
      %p188 = scmp.ne.s32.totalorder %s183, %s185
      %p189 = scmp.eq.s32.totalorder %s23, 0
      %p190 = por %p188, %p189
      %p191 = scmp.ne.s32.totalorder %s183, %s185
      %p192 = scmp.eq.s32.totalorder %s28, 1
      %p193 = por %p191, %p192
      %p194 = scmp.ne.s32.totalorder %s185, %s186
      %p195 = scmp.eq.s32.totalorder %s28, 0
      %p196 = por %p194, %p195
      %p197 = scmp.ne.s32.totalorder %s185, %s186
      %p198 = scmp.eq.s32.totalorder %s29, 1
      %p199 = por %p197, %p198
      %p201 = scmp.ne.s32.totalorder %s186, %s200
      %p202 = scmp.eq.s32.totalorder %s29, 0
      %p203 = por %p201, %p202
      %s205 = sadd.s32 %s204, 1
      %p208 = scmp.eq.s32.totalorder %s23, 1
      %p209 = scmp.ne.s32.totalorder %s204, %s206
      %p210 = scmp.eq.s32.totalorder %s23, 0
      %p211 = por %p209, %p210
      %p212 = scmp.ne.s32.totalorder %s204, %s206
      %p213 = scmp.eq.s32.totalorder %s28, 1
      %p214 = por %p212, %p213
      %p215 = scmp.ne.s32.totalorder %s206, %s207
      %p216 = scmp.eq.s32.totalorder %s28, 0
      %p217 = por %p215, %p216
      %p218 = scmp.ne.s32.totalorder %s206, %s207
      %p219 = scmp.eq.s32.totalorder %s29, 1
      %p220 = por %p218, %p219
      %p222 = scmp.ne.s32.totalorder %s207, %s221
      %p223 = scmp.eq.s32.totalorder %s29, 0
      %p224 = por %p222, %p223
      %s225 = ssub.s32 %s23, %s30
      %p226 = scmp.eq.s32.totalorder %s225, 0
      %s228 = sadd.s32 %s227, 1
      %s229 = scalar_select %p226, %s227, %s228
      %p232 = pneg %p226
      %p233 = scmp.eq.s32.totalorder %s23, 1
      %p234 = por %p232, %p233
      %p235 = scmp.ne.s32.totalorder %s227, %s230
      %p236 = scmp.eq.s32.totalorder %s23, 0
      %p237 = por %p235, %p236
      %p238 = scmp.ne.s32.totalorder %s227, %s230
      %p239 = scmp.eq.s32.totalorder %s28, 1
      %p240 = por %p238, %p239
      %p241 = scmp.ne.s32.totalorder %s230, %s231
      %p242 = scmp.eq.s32.totalorder %s28, 0
      %p243 = por %p241, %p242
      %p244 = scmp.ne.s32.totalorder %s230, %s231
      %p245 = scmp.eq.s32.totalorder %s29, 1
      %p246 = por %p244, %p245
      %p248 = scmp.ne.s32.totalorder %s231, %s247
      %p249 = scmp.eq.s32.totalorder %s29, 0
      %p250 = por %p248, %p249
      %s251 = ssub.s32 %s23, %s30
      %p252 = scmp.eq.s32.totalorder %s251, 0
      %s254 = sadd.s32 %s253, 1
      %s255 = scalar_select %p252, %s253, %s254
      %p258 = pneg %p252
      %p259 = scmp.eq.s32.totalorder %s23, 1
      %p260 = por %p258, %p259
      %p261 = scmp.ne.s32.totalorder %s253, %s256
      %p262 = scmp.eq.s32.totalorder %s23, 0
      %p263 = por %p261, %p262
      %p264 = scmp.ne.s32.totalorder %s253, %s256
      %p265 = scmp.eq.s32.totalorder %s28, 1
      %p266 = por %p264, %p265
      %p267 = scmp.ne.s32.totalorder %s256, %s257
      %p268 = scmp.eq.s32.totalorder %s28, 0
      %p269 = por %p267, %p268
      %p270 = scmp.ne.s32.totalorder %s256, %s257
      %p271 = scmp.eq.s32.totalorder %s29, 1
      %p272 = por %p270, %p271
      %p274 = scmp.ne.s32.totalorder %s257, %s273
      %p275 = scmp.eq.s32.totalorder %s29, 0
      %p276 = por %p274, %p275
      %p277 = scmp.le.s32.totalorder 1, %s23
      %p278 = scmp.lt.s32.totalorder %s23, 3
      %p279 = pnand %p277, %p278
      %p280 = pneg %p279
      // Predicated region
      $region9: #{svhn_forward.1} parent=5 // pred_check
        _
      $region10: #{svhn_forward.1} parent=5 // pred_check_branch
        %282 = sbr.rel (%p279) target = $region12
      $region11: #{svhn_forward.1} parent=5 // pred_region
        %s283 = ssub.s32 %s23, 1
        // Predicated region
        $region13: #{svhn_forward.1} parent=11 // pred_check
          %p284 = pneg %p70
        $region14: #{svhn_forward.1} parent=11 // pred_check_branch
          %286 = sbr.rel (%p284) target = $region16
        $region15: #{svhn_forward.1} parent=11 // pred_region
          _
        $region16: #{svhn_forward.1} parent=11 // pred_fallthru
          _
        // Predicated region
        $region17: #{svhn_forward.1} parent=11 // pred_check
          %p287 = pneg %p91
        $region18: #{svhn_forward.1} parent=11 // pred_check_branch
          %289 = sbr.rel (%p287) target = $region20
        $region19: #{svhn_forward.1} parent=11 // pred_region
          _
        $region20: #{svhn_forward.1} parent=11 // pred_fallthru
          _
        // Predicated region
        $region21: #{svhn_forward.1} parent=11 // pred_check
          %p290 = pneg %p112
        $region22: #{svhn_forward.1} parent=11 // pred_check_branch
          %292 = sbr.rel (%p290) target = $region24
        $region23: #{svhn_forward.1} parent=11 // pred_region
          _
        $region24: #{svhn_forward.1} parent=11 // pred_fallthru
          _
        // Predicated region
        $region25: #{svhn_forward.1} parent=11 // pred_check
          %p293 = pneg %p133
        $region26: #{svhn_forward.1} parent=11 // pred_check_branch
          %295 = sbr.rel (%p293) target = $region28
        $region27: #{svhn_forward.1} parent=11 // pred_region
          _
        $region28: #{svhn_forward.1} parent=11 // pred_fallthru
          _
        // Predicated region
        $region29: #{svhn_forward.1} parent=11 // pred_check
          %p296 = pneg %p154
        $region30: #{svhn_forward.1} parent=11 // pred_check_branch
          %298 = sbr.rel (%p296) target = $region32
        $region31: #{svhn_forward.1} parent=11 // pred_region
          _
        $region32: #{svhn_forward.1} parent=11 // pred_fallthru
          _
        // Predicated region
        $region33: #{svhn_forward.1} parent=11 // pred_check
          %p299 = pneg %p175
        $region34: #{svhn_forward.1} parent=11 // pred_check_branch
          %301 = sbr.rel (%p299) target = $region36
        $region35: #{svhn_forward.1} parent=11 // pred_region
          _
        $region36: #{svhn_forward.1} parent=11 // pred_fallthru
          _
        // Predicated region
        $region37: #{svhn_forward.1} parent=11 // pred_check
          %p302 = pneg %p196
        $region38: #{svhn_forward.1} parent=11 // pred_check_branch
          %304 = sbr.rel (%p302) target = $region40
        $region39: #{svhn_forward.1} parent=11 // pred_region
          _
        $region40: #{svhn_forward.1} parent=11 // pred_fallthru
          _
        // Predicated region
        $region41: #{svhn_forward.1} parent=11 // pred_check
          %p305 = pneg %p217
        $region42: #{svhn_forward.1} parent=11 // pred_check_branch
          %307 = sbr.rel (%p305) target = $region44
        $region43: #{svhn_forward.1} parent=11 // pred_region
          _
        $region44: #{svhn_forward.1} parent=11 // pred_fallthru
          _
      $region12: #{svhn_forward.1} parent=5 // pred_fallthru
        _
      %p308 = scmp.lt.s32.totalorder %s23, 2
      // Predicated region
      $region45: #{svhn_forward.1} parent=5 // pred_check
        %p309 = pneg %p308
      $region46: #{svhn_forward.1} parent=5 // pred_check_branch
        %311 = sbr.rel (%p309) target = $region48
      $region47: #{svhn_forward.1} parent=5 // pred_region
        // Predicated region
        $region49: #{svhn_forward.1} parent=47 // pred_check
          %p312 = pneg %p43
        $region50: #{svhn_forward.1} parent=47 // pred_check_branch
          %314 = sbr.rel (%p312) target = $region52
        $region51: #{svhn_forward.1} parent=47 // pred_region
          %p315 = scmp.lt.s32.totalorder %s23, 1
          %s316 = scalar_select %p315, %s23, 1
          %s317 = smul.addr %s316, 8
          %s318 = smul.addr %s317, 8
          %s319 = scalar_lea.vmem %s0, %s318
        $region52: #{svhn_forward.1} parent=47 // pred_fallthru
          _
      $region48: #{svhn_forward.1} parent=5 // pred_fallthru
        _
      %p320 = scmp.le.s32.totalorder 1, %s23
      %p321 = scmp.lt.s32.totalorder %s23, 3
      %p322 = pnand %p320, %p321
      %p323 = pneg %p322
      // Predicated region
      $region53: #{svhn_forward.1} parent=5 // pred_check
        _
      $region54: #{svhn_forward.1} parent=5 // pred_check_branch
        %325 = sbr.rel (%p322) target = $region56
      $region55: #{svhn_forward.1} parent=5 // pred_region
        %s326 = ssub.s32 %s23, 1
        %p327 = scmp.lt.s32.totalorder %s28, 1
        %s328 = scalar_select %p327, %s28, 1
        %s329 = smul.addr %s328, 8
        %s330 = smul.addr %s329, 8
        %s331 = scalar_lea.vmem %s0, %s330
        %p332 = pneg %p49
        %p333 = pneg %p46
        %p334 = pneg %p70
        %p335 = pneg %p67
        %p336 = pneg %p91
        %p337 = pneg %p88
        %p338 = pneg %p112
        %p339 = pneg %p109
        %p340 = pneg %p133
        %p341 = pneg %p130
        %p342 = pneg %p154
        %p343 = pneg %p151
        %p344 = pneg %p175
        %p345 = pneg %p172
        %p346 = pneg %p196
        %p347 = pneg %p193
        %p348 = pneg %p217
        %p349 = pneg %p214
        %p350 = pneg %p243
        %p351 = pneg %p240
        %s352 = sand.u32 %s230, 1
        %s353 = scalar_lea.sflag [#allocation6], %s352
        %s354 = sand.u32 %s230, 1
        %s355 = scalar_lea.vmem [#allocation5], %s354
        %p356 = pneg %p269
        %p357 = pneg %p266
        %s358 = sand.u32 %s256, 1
        %s359 = scalar_lea.sflag [#allocation8], %s358
        %s360 = sand.u32 %s256, 1
        %s361 = scalar_lea.vmem [#allocation7], %s360
        %p362 = scmp.lt.s32.totalorder %s28, 1
        %s363 = scalar_select %p362, %s28, 1
        %s364 = smul.addr %s363, 8
        %s365 = smul.addr %s364, 8
        %s366 = scalar_lea.vmem %s0, %s365
        %vm368 = vcmask 23552
        %369 = vst.msk [vmem:[#allocation2] sm:$0xff] %vm368, 0.0
        %370 = vst.msk [vmem:[#allocation2 + $0x8] sm:$0xff] %vm368, 0.0
        %371 = vst.msk [vmem:[#allocation2 + $0x10] sm:$0xff] %vm368, 0.0
        %372 = vst.msk [vmem:[#allocation2 + $0x18] sm:$0xff] %vm368, 0.0
        %373 = vst.msk [vmem:[#allocation2 + $0x20] sm:$0xff] %vm368, 0.0
        %374 = vst.msk [vmem:[#allocation2 + $0x28] sm:$0xff] %vm368, 0.0
        %375 = vst.msk [vmem:[#allocation2 + $0x30] sm:$0xff] %vm368, 0.0
        %376 = vst.msk [vmem:[#allocation2 + $0x38] sm:$0xff] %vm368, 0.0
        %377 = vst.msk [vmem:[#allocation2 + $0x40] sm:$0xff] %vm368, 0.0
        %378 = vst.msk [vmem:[#allocation2 + $0x48] sm:$0xff] %vm368, 0.0
        %379 = vst.msk [vmem:[#allocation2 + $0x50] sm:$0xff] %vm368, 0.0
        %380 = vst.msk [vmem:[#allocation2 + $0x58] sm:$0xff] %vm368, 0.0
        %381 = vst.msk [vmem:[#allocation2 + $0x60] sm:$0xff] %vm368, 0.0
        %382 = vst.msk [vmem:[#allocation2 + $0x68] sm:$0xff] %vm368, 0.0
        %383 = vst.msk [vmem:[#allocation2 + $0x70] sm:$0xff] %vm368, 0.0
        %384 = vst.msk [vmem:[#allocation2 + $0x78] sm:$0xff] %vm368, 0.0
        %385 = vst.msk [vmem:[#allocation2 + $0x80] sm:$0xff] %vm368, 0.0
        %386 = vst.msk [vmem:[#allocation2 + $0x88] sm:$0xff] %vm368, 0.0
        %387 = vst.msk [vmem:[#allocation2 + $0x90] sm:$0xff] %vm368, 0.0
        %388 = vst.msk [vmem:[#allocation2 + $0x98] sm:$0xff] %vm368, 0.0
        %389 = vst.msk [vmem:[#allocation2 + $0xa0] sm:$0xff] %vm368, 0.0
        %390 = vst.msk [vmem:[#allocation2 + $0xa8] sm:$0xff] %vm368, 0.0
        %391 = vst.msk [vmem:[#allocation2 + $0xb0] sm:$0xff] %vm368, 0.0
        %392 = vst.msk [vmem:[#allocation2 + $0xb8] sm:$0xff] %vm368, 0.0
        %393 = vst.msk [vmem:[#allocation2 + $0xc0] sm:$0xff] %vm368, 0.0
        %394 = vst.msk [vmem:[#allocation2 + $0xc8] sm:$0xff] %vm368, 0.0
        %vm395 = vcmask 130048
        %396 = vst.msk [vmem:[#allocation3] sm:$0xff] %vm395, 0.0
        %397 = vst.msk [vmem:[#allocation3 + $0x8] sm:$0xff] %vm395, 0.0
        %398 = vst.msk [vmem:[#allocation3 + $0x10] sm:$0xff] %vm395, 0.0
        %399 = vst.msk [vmem:[#allocation3 + $0x18] sm:$0xff] %vm395, 0.0
        %400 = vst.msk [vmem:[#allocation3 + $0x20] sm:$0xff] %vm395, 0.0
        %401 = vst.msk [vmem:[#allocation3 + $0x28] sm:$0xff] %vm395, 0.0
        %402 = vst.msk [vmem:[#allocation3 + $0x30] sm:$0xff] %vm395, 0.0
        %403 = vst.msk [vmem:[#allocation3 + $0x38] sm:$0xff] %vm395, 0.0
        %404 = vst.msk [vmem:[#allocation3 + $0x40] sm:$0xff] %vm395, 0.0
        %405 = vst.msk [vmem:[#allocation3 + $0x48] sm:$0xff] %vm395, 0.0
        %vm406 = vcmask 261120
        %407 = vst.msk [vmem:[#allocation4] sm:$0xff] %vm406, 0.0
        %408 = vst.msk [vmem:[#allocation4 + $0x8] sm:$0xff] %vm406, 0.0
        %409 = vst.msk [vmem:[#allocation4 + $0x10] sm:$0xff] %vm406, 0.0
        %410 = vst.msk [vmem:[#allocation4 + $0x18] sm:$0xff] %vm406, 0.0
        %411 = vst.msk [vmem:[#allocation4 + $0x20] sm:$0xff] %vm406, 0.0
        %412 = vst.msk [vmem:[#allocation4 + $0x28] sm:$0xff] %vm406, 0.0
        %413 = vst.msk [vmem:[#allocation4 + $0x30] sm:$0xff] %vm406, 0.0
        %414 = vst.msk [vmem:[#allocation4 + $0x38] sm:$0xff] %vm406, 0.0
        %v415 = vld [vmem:[%s366] sm:$0xff]
        %416 = vst.msk [vmem:[#allocation2 + $0x29] sm:$0xff] %vm368, %v415
        %v417 = vld [vmem:[%s366 + $0x8] sm:$0xff]
        %418 = vst.msk [vmem:[#allocation2 + $0x39] sm:$0xff] %vm368, %v417
        %v419 = vld [vmem:[%s366 + $0x10] sm:$0xff]
        %420 = vst.msk [vmem:[#allocation2 + $0x49] sm:$0xff] %vm368, %v419
        %v421 = vld [vmem:[%s366 + $0x18] sm:$0xff]
        %422 = vst.msk [vmem:[#allocation2 + $0x59] sm:$0xff] %vm368, %v421
        %v423 = vld [vmem:[%s366 + $0x20] sm:$0xff]
        %424 = vst.msk [vmem:[#allocation2 + $0x69] sm:$0xff] %vm368, %v423
        %v425 = vld [vmem:[%s366 + $0x28] sm:$0xff]
        %426 = vst.msk [vmem:[#allocation2 + $0x79] sm:$0xff] %vm368, %v425
        %v427 = vld [vmem:[%s366 + $0x30] sm:$0xff]
        %428 = vst.msk [vmem:[#allocation2 + $0x89] sm:$0xff] %vm368, %v427
        %v429 = vld [vmem:[%s366 + $0x38] sm:$0xff]
        %430 = vst.msk [vmem:[#allocation2 + $0x99] sm:$0xff] %vm368, %v429
        %v431 = vld [vmem:[#allocation2 + $0x7] sm:$0xff]
        %v432 = vld [vmem:[#allocation2 + $0xf] sm:$0xff]
        %v433 = vld [vmem:[#allocation2 + $0x17] sm:$0xff]
        %v434 = vld [vmem:[#allocation2 + $0x1f] sm:$0xff]
        %v435 = vld [vmem:[#allocation2 + $0x27] sm:$0xff]
        %v436 = vld [vmem:[#allocation2 + $0x2f] sm:$0xff]
        %v437 = vld [vmem:[#allocation2 + $0x37] sm:$0xff]
        %v438 = vld [vmem:[#allocation2 + $0x3f] sm:$0xff]
        %v439 = vld [vmem:[#allocation2 + $0x47] sm:$0xff]
        %v440 = vld [vmem:[#allocation2 + $0x4f] sm:$0xff]
        %v441 = vld [vmem:[#allocation2 + $0x57] sm:$0xff]
        %v442 = vld [vmem:[#allocation2 + $0x5f] sm:$0xff]
        %v443 = vld [vmem:[#allocation2 + $0x67] sm:$0xff]
        %v444 = vld [vmem:[#allocation2 + $0x6f] sm:$0xff]
        %v445 = vld [vmem:[#allocation2 + $0x77] sm:$0xff]
        %v446 = vld [vmem:[#allocation2 + $0x7f] sm:$0xff]
        %v447 = vld [vmem:[#allocation2 + $0x87] sm:$0xff]
        %v448 = vld [vmem:[#allocation2 + $0x8f] sm:$0xff]
        %v449 = vld [vmem:[#allocation2 + $0x97] sm:$0xff]
        %v450 = vld [vmem:[#allocation2 + $0x9f] sm:$0xff]
        %v451 = vld [vmem:[#allocation2 + $0x8] sm:$0xff]
        %v452 = vld [vmem:[#allocation2 + $0x10] sm:$0xff]
        %v453 = vld [vmem:[#allocation2 + $0x18] sm:$0xff]
        %v454 = vld [vmem:[#allocation2 + $0x20] sm:$0xff]
        %v455 = vld [vmem:[#allocation2 + $0x28] sm:$0xff]
        %v456 = vld [vmem:[#allocation2 + $0x30] sm:$0xff]
        %v457 = vld [vmem:[#allocation2 + $0x38] sm:$0xff]
        %v458 = vld [vmem:[#allocation2 + $0x40] sm:$0xff]
        %v459 = vld [vmem:[#allocation2 + $0x48] sm:$0xff]
        %v460 = vld [vmem:[#allocation2 + $0x50] sm:$0xff]
        %v461 = vld [vmem:[#allocation2 + $0x58] sm:$0xff]
        %v462 = vld [vmem:[#allocation2 + $0x60] sm:$0xff]
        %v463 = vld [vmem:[#allocation2 + $0x68] sm:$0xff]
        %v464 = vld [vmem:[#allocation2 + $0x70] sm:$0xff]
        %v465 = vld [vmem:[#allocation2 + $0x78] sm:$0xff]
        %v466 = vld [vmem:[#allocation2 + $0x80] sm:$0xff]
        %v467 = vld [vmem:[#allocation2 + $0x88] sm:$0xff]
        %v468 = vld [vmem:[#allocation2 + $0x90] sm:$0xff]
        %v469 = vld [vmem:[#allocation2 + $0x98] sm:$0xff]
        %v470 = vld [vmem:[#allocation2 + $0xa0] sm:$0xff]
        %v471 = vld [vmem:[#allocation2 + $0x9] sm:$0xff]
        %v472 = vld [vmem:[#allocation2 + $0x11] sm:$0xff]
        %v473 = vld [vmem:[#allocation2 + $0x19] sm:$0xff]
        %v474 = vld [vmem:[#allocation2 + $0x21] sm:$0xff]
        %v475 = vld [vmem:[#allocation2 + $0x29] sm:$0xff]
        %v476 = vld [vmem:[#allocation2 + $0x31] sm:$0xff]
        %v477 = vld [vmem:[#allocation2 + $0x39] sm:$0xff]
        %v478 = vld [vmem:[#allocation2 + $0x41] sm:$0xff]
        %v479 = vld [vmem:[#allocation2 + $0x49] sm:$0xff]
        %v480 = vld [vmem:[#allocation2 + $0x51] sm:$0xff]
        %v481 = vld [vmem:[#allocation2 + $0x59] sm:$0xff]
        %v482 = vld [vmem:[#allocation2 + $0x61] sm:$0xff]
        %v483 = vld [vmem:[#allocation2 + $0x69] sm:$0xff]
        %v484 = vld [vmem:[#allocation2 + $0x71] sm:$0xff]
        %v485 = vld [vmem:[#allocation2 + $0x79] sm:$0xff]
        %v486 = vld [vmem:[#allocation2 + $0x81] sm:$0xff]
        %v487 = vld [vmem:[#allocation2 + $0x89] sm:$0xff]
        %v488 = vld [vmem:[#allocation2 + $0x91] sm:$0xff]
        %v489 = vld [vmem:[#allocation2 + $0x99] sm:$0xff]
        %v490 = vld [vmem:[#allocation2 + $0xa1] sm:$0xff]
        %v491 = vld [vmem:[#allocation2 + $0xa7] sm:$0xff]
        %v492 = vld [vmem:[#allocation2 + $0xaf] sm:$0xff]
        %v493 = vld [vmem:[#allocation2 + $0xa8] sm:$0xff]
        %v494 = vld [vmem:[#allocation2 + $0xb0] sm:$0xff]
        %v495 = vld [vmem:[#allocation2 + $0xa9] sm:$0xff]
        %v496 = vld [vmem:[#allocation2 + $0xb1] sm:$0xff]
        %v497 = vld [vmem:[#allocation2 + $0xb7] sm:$0xff]
        %v498 = vld [vmem:[#allocation2 + $0xbf] sm:$0xff]
        %v499 = vld [vmem:[#allocation2 + $0xb8] sm:$0xff]
        %v500 = vld [vmem:[#allocation2 + $0xc0] sm:$0xff]
        %v501 = vld [vmem:[#allocation2 + $0xb9] sm:$0xff]
        %v502 = vld [vmem:[#allocation2 + $0xc1] sm:$0xff]
        %523 = vrot.lane.b32.xlu0 %v451, 3
        %v524 = vpop.permute.xlu0 %523
        %525 = vrot.lane.b32.xlu0 %v452, 3
        %v526 = vpop.permute.xlu0 %525
        %527 = vrot.lane.b32.xlu0 %v453, 3
        %v528 = vpop.permute.xlu0 %527
        %529 = vrot.lane.b32.xlu0 %v454, 3
        %v530 = vpop.permute.xlu0 %529
        %531 = vrot.lane.b32.xlu0 %v455, 3
        %v532 = vpop.permute.xlu0 %531
        %533 = vrot.lane.b32.xlu0 %v456, 3
        %v534 = vpop.permute.xlu0 %533
        %535 = vrot.lane.b32.xlu0 %v457, 3
        %v536 = vpop.permute.xlu0 %535
        %537 = vrot.lane.b32.xlu0 %v458, 3
        %v538 = vpop.permute.xlu0 %537
        %539 = vrot.lane.b32.xlu0 %v459, 3
        %v540 = vpop.permute.xlu0 %539
        %541 = vrot.lane.b32.xlu0 %v460, 3
        %v542 = vpop.permute.xlu0 %541
        %543 = vrot.lane.b32.xlu0 %v461, 3
        %v544 = vpop.permute.xlu0 %543
        %545 = vrot.lane.b32.xlu0 %v462, 3
        %v546 = vpop.permute.xlu0 %545
        %547 = vrot.lane.b32.xlu0 %v463, 3
        %v548 = vpop.permute.xlu0 %547
        %549 = vrot.lane.b32.xlu0 %v464, 3
        %v550 = vpop.permute.xlu0 %549
        %551 = vrot.lane.b32.xlu0 %v465, 3
        %v552 = vpop.permute.xlu0 %551
        %553 = vrot.lane.b32.xlu0 %v466, 3
        %v554 = vpop.permute.xlu0 %553
        %555 = vrot.lane.b32.xlu0 %v467, 3
        %v556 = vpop.permute.xlu0 %555
        %557 = vrot.lane.b32.xlu0 %v468, 3
        %v558 = vpop.permute.xlu0 %557
        %559 = vrot.lane.b32.xlu0 %v469, 3
        %v560 = vpop.permute.xlu0 %559
        %561 = vrot.lane.b32.xlu0 %v470, 3
        %v562 = vpop.permute.xlu0 %561
        %603 = vrot.lane.b32.xlu0 %v471, 6
        %v604 = vpop.permute.xlu0 %603
        %605 = vrot.lane.b32.xlu0 %v472, 6
        %v606 = vpop.permute.xlu0 %605
        %607 = vrot.lane.b32.xlu0 %v473, 6
        %v608 = vpop.permute.xlu0 %607
        %609 = vrot.lane.b32.xlu0 %v474, 6
        %v610 = vpop.permute.xlu0 %609
        %611 = vrot.lane.b32.xlu0 %v475, 6
        %v612 = vpop.permute.xlu0 %611
        %613 = vrot.lane.b32.xlu0 %v476, 6
        %v614 = vpop.permute.xlu0 %613
        %615 = vrot.lane.b32.xlu0 %v477, 6
        %v616 = vpop.permute.xlu0 %615
        %617 = vrot.lane.b32.xlu0 %v478, 6
        %v618 = vpop.permute.xlu0 %617
        %619 = vrot.lane.b32.xlu0 %v479, 6
        %v620 = vpop.permute.xlu0 %619
        %621 = vrot.lane.b32.xlu0 %v480, 6
        %v622 = vpop.permute.xlu0 %621
        %623 = vrot.lane.b32.xlu0 %v481, 6
        %v624 = vpop.permute.xlu0 %623
        %625 = vrot.lane.b32.xlu0 %v482, 6
        %v626 = vpop.permute.xlu0 %625
        %627 = vrot.lane.b32.xlu0 %v483, 6
        %v628 = vpop.permute.xlu0 %627
        %629 = vrot.lane.b32.xlu0 %v484, 6
        %v630 = vpop.permute.xlu0 %629
        %631 = vrot.lane.b32.xlu0 %v485, 6
        %v632 = vpop.permute.xlu0 %631
        %633 = vrot.lane.b32.xlu0 %v486, 6
        %v634 = vpop.permute.xlu0 %633
        %635 = vrot.lane.b32.xlu0 %v487, 6
        %v636 = vpop.permute.xlu0 %635
        %637 = vrot.lane.b32.xlu0 %v488, 6
        %v638 = vpop.permute.xlu0 %637
        %639 = vrot.lane.b32.xlu0 %v489, 6
        %v640 = vpop.permute.xlu0 %639
        %641 = vrot.lane.b32.xlu0 %v490, 6
        %v642 = vpop.permute.xlu0 %641
        %683 = vrot.lane.b32.xlu0 %v433, 9
        %v684 = vpop.permute.xlu0 %683
        %685 = vrot.lane.b32.xlu0 %v434, 9
        %v686 = vpop.permute.xlu0 %685
        %687 = vrot.lane.b32.xlu0 %v435, 9
        %v688 = vpop.permute.xlu0 %687
        %689 = vrot.lane.b32.xlu0 %v436, 9
        %v690 = vpop.permute.xlu0 %689
        %691 = vrot.lane.b32.xlu0 %v437, 9
        %v692 = vpop.permute.xlu0 %691
        %693 = vrot.lane.b32.xlu0 %v438, 9
        %v694 = vpop.permute.xlu0 %693
        %695 = vrot.lane.b32.xlu0 %v439, 9
        %v696 = vpop.permute.xlu0 %695
        %697 = vrot.lane.b32.xlu0 %v440, 9
        %v698 = vpop.permute.xlu0 %697
        %699 = vrot.lane.b32.xlu0 %v441, 9
        %v700 = vpop.permute.xlu0 %699
        %701 = vrot.lane.b32.xlu0 %v442, 9
        %v702 = vpop.permute.xlu0 %701
        %703 = vrot.lane.b32.xlu0 %v443, 9
        %v704 = vpop.permute.xlu0 %703
        %705 = vrot.lane.b32.xlu0 %v444, 9
        %v706 = vpop.permute.xlu0 %705
        %707 = vrot.lane.b32.xlu0 %v445, 9
        %v708 = vpop.permute.xlu0 %707
        %709 = vrot.lane.b32.xlu0 %v446, 9
        %v710 = vpop.permute.xlu0 %709
        %711 = vrot.lane.b32.xlu0 %v447, 9
        %v712 = vpop.permute.xlu0 %711
        %713 = vrot.lane.b32.xlu0 %v448, 9
        %v714 = vpop.permute.xlu0 %713
        %715 = vrot.lane.b32.xlu0 %v449, 9
        %v716 = vpop.permute.xlu0 %715
        %717 = vrot.lane.b32.xlu0 %v450, 9
        %v718 = vpop.permute.xlu0 %717
        %719 = vrot.lane.b32.xlu0 %v491, 9
        %v720 = vpop.permute.xlu0 %719
        %721 = vrot.lane.b32.xlu0 %v492, 9
        %v722 = vpop.permute.xlu0 %721
        %745 = vrot.lane.b32.xlu0 %v453, 12
        %v746 = vpop.permute.xlu0 %745
        %747 = vrot.lane.b32.xlu0 %v454, 12
        %v748 = vpop.permute.xlu0 %747
        %749 = vrot.lane.b32.xlu0 %v455, 12
        %v750 = vpop.permute.xlu0 %749
        %751 = vrot.lane.b32.xlu0 %v456, 12
        %v752 = vpop.permute.xlu0 %751
        %753 = vrot.lane.b32.xlu0 %v457, 12
        %v754 = vpop.permute.xlu0 %753
        %755 = vrot.lane.b32.xlu0 %v458, 12
        %v756 = vpop.permute.xlu0 %755
        %757 = vrot.lane.b32.xlu0 %v459, 12
        %v758 = vpop.permute.xlu0 %757
        %759 = vrot.lane.b32.xlu0 %v460, 12
        %v760 = vpop.permute.xlu0 %759
        %761 = vrot.lane.b32.xlu0 %v461, 12
        %v762 = vpop.permute.xlu0 %761
        %763 = vrot.lane.b32.xlu0 %v462, 12
        %v764 = vpop.permute.xlu0 %763
        %765 = vrot.lane.b32.xlu0 %v463, 12
        %v766 = vpop.permute.xlu0 %765
        %767 = vrot.lane.b32.xlu0 %v464, 12
        %v768 = vpop.permute.xlu0 %767
        %769 = vrot.lane.b32.xlu0 %v465, 12
        %v770 = vpop.permute.xlu0 %769
        %771 = vrot.lane.b32.xlu0 %v466, 12
        %v772 = vpop.permute.xlu0 %771
        %773 = vrot.lane.b32.xlu0 %v467, 12
        %v774 = vpop.permute.xlu0 %773
        %775 = vrot.lane.b32.xlu0 %v468, 12
        %v776 = vpop.permute.xlu0 %775
        %777 = vrot.lane.b32.xlu0 %v469, 12
        %v778 = vpop.permute.xlu0 %777
        %779 = vrot.lane.b32.xlu0 %v470, 12
        %v780 = vpop.permute.xlu0 %779
        %781 = vrot.lane.b32.xlu0 %v493, 12
        %v782 = vpop.permute.xlu0 %781
        %783 = vrot.lane.b32.xlu0 %v494, 12
        %v784 = vpop.permute.xlu0 %783
        %807 = vrot.lane.b32.xlu0 %v473, 15
        %v808 = vpop.permute.xlu0 %807
        %809 = vrot.lane.b32.xlu0 %v474, 15
        %v810 = vpop.permute.xlu0 %809
        %811 = vrot.lane.b32.xlu0 %v475, 15
        %v812 = vpop.permute.xlu0 %811
        %813 = vrot.lane.b32.xlu0 %v476, 15
        %v814 = vpop.permute.xlu0 %813
        %815 = vrot.lane.b32.xlu0 %v477, 15
        %v816 = vpop.permute.xlu0 %815
        %817 = vrot.lane.b32.xlu0 %v478, 15
        %v818 = vpop.permute.xlu0 %817
        %819 = vrot.lane.b32.xlu0 %v479, 15
        %v820 = vpop.permute.xlu0 %819
        %821 = vrot.lane.b32.xlu0 %v480, 15
        %v822 = vpop.permute.xlu0 %821
        %823 = vrot.lane.b32.xlu0 %v481, 15
        %v824 = vpop.permute.xlu0 %823
        %825 = vrot.lane.b32.xlu0 %v482, 15
        %v826 = vpop.permute.xlu0 %825
        %827 = vrot.lane.b32.xlu0 %v483, 15
        %v828 = vpop.permute.xlu0 %827
        %829 = vrot.lane.b32.xlu0 %v484, 15
        %v830 = vpop.permute.xlu0 %829
        %831 = vrot.lane.b32.xlu0 %v485, 15
        %v832 = vpop.permute.xlu0 %831
        %833 = vrot.lane.b32.xlu0 %v486, 15
        %v834 = vpop.permute.xlu0 %833
        %835 = vrot.lane.b32.xlu0 %v487, 15
        %v836 = vpop.permute.xlu0 %835
        %837 = vrot.lane.b32.xlu0 %v488, 15
        %v838 = vpop.permute.xlu0 %837
        %839 = vrot.lane.b32.xlu0 %v489, 15
        %v840 = vpop.permute.xlu0 %839
        %841 = vrot.lane.b32.xlu0 %v490, 15
        %v842 = vpop.permute.xlu0 %841
        %843 = vrot.lane.b32.xlu0 %v495, 15
        %v844 = vpop.permute.xlu0 %843
        %845 = vrot.lane.b32.xlu0 %v496, 15
        %v846 = vpop.permute.xlu0 %845
        %869 = vrot.lane.b32.xlu0 %v435, 18
        %v870 = vpop.permute.xlu0 %869
        %871 = vrot.lane.b32.xlu0 %v436, 18
        %v872 = vpop.permute.xlu0 %871
        %873 = vrot.lane.b32.xlu0 %v437, 18
        %v874 = vpop.permute.xlu0 %873
        %875 = vrot.lane.b32.xlu0 %v438, 18
        %v876 = vpop.permute.xlu0 %875
        %877 = vrot.lane.b32.xlu0 %v439, 18
        %v878 = vpop.permute.xlu0 %877
        %879 = vrot.lane.b32.xlu0 %v440, 18
        %v880 = vpop.permute.xlu0 %879
        %881 = vrot.lane.b32.xlu0 %v441, 18
        %v882 = vpop.permute.xlu0 %881
        %883 = vrot.lane.b32.xlu0 %v442, 18
        %v884 = vpop.permute.xlu0 %883
        %885 = vrot.lane.b32.xlu0 %v443, 18
        %v886 = vpop.permute.xlu0 %885
        %887 = vrot.lane.b32.xlu0 %v444, 18
        %v888 = vpop.permute.xlu0 %887
        %889 = vrot.lane.b32.xlu0 %v445, 18
        %v890 = vpop.permute.xlu0 %889
        %891 = vrot.lane.b32.xlu0 %v446, 18
        %v892 = vpop.permute.xlu0 %891
        %893 = vrot.lane.b32.xlu0 %v447, 18
        %v894 = vpop.permute.xlu0 %893
        %895 = vrot.lane.b32.xlu0 %v448, 18
        %v896 = vpop.permute.xlu0 %895
        %897 = vrot.lane.b32.xlu0 %v449, 18
        %v898 = vpop.permute.xlu0 %897
        %899 = vrot.lane.b32.xlu0 %v450, 18
        %v900 = vpop.permute.xlu0 %899
        %901 = vrot.lane.b32.xlu0 %v491, 18
        %v902 = vpop.permute.xlu0 %901
        %903 = vrot.lane.b32.xlu0 %v492, 18
        %v904 = vpop.permute.xlu0 %903
        %905 = vrot.lane.b32.xlu0 %v497, 18
        %v906 = vpop.permute.xlu0 %905
        %907 = vrot.lane.b32.xlu0 %v498, 18
        %v908 = vpop.permute.xlu0 %907
        %931 = vrot.lane.b32.xlu0 %v455, 21
        %v932 = vpop.permute.xlu0 %931
        %933 = vrot.lane.b32.xlu0 %v456, 21
        %v934 = vpop.permute.xlu0 %933
        %935 = vrot.lane.b32.xlu0 %v457, 21
        %v936 = vpop.permute.xlu0 %935
        %937 = vrot.lane.b32.xlu0 %v458, 21
        %v938 = vpop.permute.xlu0 %937
        %939 = vrot.lane.b32.xlu0 %v459, 21
        %v940 = vpop.permute.xlu0 %939
        %941 = vrot.lane.b32.xlu0 %v460, 21
        %v942 = vpop.permute.xlu0 %941
        %943 = vrot.lane.b32.xlu0 %v461, 21
        %v944 = vpop.permute.xlu0 %943
        %945 = vrot.lane.b32.xlu0 %v462, 21
        %v946 = vpop.permute.xlu0 %945
        %947 = vrot.lane.b32.xlu0 %v463, 21
        %v948 = vpop.permute.xlu0 %947
        %949 = vrot.lane.b32.xlu0 %v464, 21
        %v950 = vpop.permute.xlu0 %949
        %951 = vrot.lane.b32.xlu0 %v465, 21
        %v952 = vpop.permute.xlu0 %951
        %953 = vrot.lane.b32.xlu0 %v466, 21
        %v954 = vpop.permute.xlu0 %953
        %955 = vrot.lane.b32.xlu0 %v467, 21
        %v956 = vpop.permute.xlu0 %955
        %957 = vrot.lane.b32.xlu0 %v468, 21
        %v958 = vpop.permute.xlu0 %957
        %959 = vrot.lane.b32.xlu0 %v469, 21
        %v960 = vpop.permute.xlu0 %959
        %961 = vrot.lane.b32.xlu0 %v470, 21
        %v962 = vpop.permute.xlu0 %961
        %963 = vrot.lane.b32.xlu0 %v493, 21
        %v964 = vpop.permute.xlu0 %963
        %965 = vrot.lane.b32.xlu0 %v494, 21
        %v966 = vpop.permute.xlu0 %965
        %967 = vrot.lane.b32.xlu0 %v499, 21
        %v968 = vpop.permute.xlu0 %967
        %969 = vrot.lane.b32.xlu0 %v500, 21
        %v970 = vpop.permute.xlu0 %969
        %993 = vrot.lane.b32.xlu0 %v475, 24
        %v994 = vpop.permute.xlu0 %993
        %995 = vrot.lane.b32.xlu0 %v476, 24
        %v996 = vpop.permute.xlu0 %995
        %997 = vrot.lane.b32.xlu0 %v477, 24
        %v998 = vpop.permute.xlu0 %997
        %999 = vrot.lane.b32.xlu0 %v478, 24
        %v1000 = vpop.permute.xlu0 %999
        %1001 = vrot.lane.b32.xlu0 %v479, 24
        %v1002 = vpop.permute.xlu0 %1001
        %1003 = vrot.lane.b32.xlu0 %v480, 24
        %v1004 = vpop.permute.xlu0 %1003
        %1005 = vrot.lane.b32.xlu0 %v481, 24
        %v1006 = vpop.permute.xlu0 %1005
        %1007 = vrot.lane.b32.xlu0 %v482, 24
        %v1008 = vpop.permute.xlu0 %1007
        %1009 = vrot.lane.b32.xlu0 %v483, 24
        %v1010 = vpop.permute.xlu0 %1009
        %1011 = vrot.lane.b32.xlu0 %v484, 24
        %v1012 = vpop.permute.xlu0 %1011
        %1013 = vrot.lane.b32.xlu0 %v485, 24
        %v1014 = vpop.permute.xlu0 %1013
        %1015 = vrot.lane.b32.xlu0 %v486, 24
        %v1016 = vpop.permute.xlu0 %1015
        %1017 = vrot.lane.b32.xlu0 %v487, 24
        %v1018 = vpop.permute.xlu0 %1017
        %1019 = vrot.lane.b32.xlu0 %v488, 24
        %v1020 = vpop.permute.xlu0 %1019
        %1021 = vrot.lane.b32.xlu0 %v489, 24
        %v1022 = vpop.permute.xlu0 %1021
        %1023 = vrot.lane.b32.xlu0 %v490, 24
        %v1024 = vpop.permute.xlu0 %1023
        %1025 = vrot.lane.b32.xlu0 %v495, 24
        %v1026 = vpop.permute.xlu0 %1025
        %1027 = vrot.lane.b32.xlu0 %v496, 24
        %v1028 = vpop.permute.xlu0 %1027
        %1029 = vrot.lane.b32.xlu0 %v501, 24
        %v1030 = vpop.permute.xlu0 %1029
        %1031 = vrot.lane.b32.xlu0 %v502, 24
        %v1032 = vpop.permute.xlu0 %1031
        %v1053 = vsel %vm368, %v431, %v524
        %v1054 = vsel %vm368, %v432, %v526
        %v1055 = vsel %vm368, %v433, %v528
        %v1056 = vsel %vm368, %v434, %v530
        %v1057 = vsel %vm368, %v435, %v532
        %v1058 = vsel %vm368, %v436, %v534
        %v1059 = vsel %vm368, %v437, %v536
        %v1060 = vsel %vm368, %v438, %v538
        %v1061 = vsel %vm368, %v439, %v540
        %v1062 = vsel %vm368, %v440, %v542
        %v1063 = vsel %vm368, %v441, %v544
        %v1064 = vsel %vm368, %v442, %v546
        %v1065 = vsel %vm368, %v443, %v548
        %v1066 = vsel %vm368, %v444, %v550
        %v1067 = vsel %vm368, %v445, %v552
        %v1068 = vsel %vm368, %v446, %v554
        %v1069 = vsel %vm368, %v447, %v556
        %v1070 = vsel %vm368, %v448, %v558
        %v1071 = vsel %vm368, %v449, %v560
        %v1072 = vsel %vm368, %v450, %v562
        %vm1073 = vcmask 48128
        %v1074 = vsel %vm1073, %v1053, %v604
        %v1075 = vsel %vm1073, %v1054, %v606
        %v1076 = vsel %vm1073, %v1055, %v608
        %v1077 = vsel %vm1073, %v1056, %v610
        %v1078 = vsel %vm1073, %v1057, %v612
        %v1079 = vsel %vm1073, %v1058, %v614
        %v1080 = vsel %vm1073, %v1059, %v616
        %v1081 = vsel %vm1073, %v1060, %v618
        %v1082 = vsel %vm1073, %v1061, %v620
        %v1083 = vsel %vm1073, %v1062, %v622
        %v1084 = vsel %vm1073, %v1063, %v624
        %v1085 = vsel %vm1073, %v1064, %v626
        %v1086 = vsel %vm1073, %v1065, %v628
        %v1087 = vsel %vm1073, %v1066, %v630
        %v1088 = vsel %vm1073, %v1067, %v632
        %v1089 = vsel %vm1073, %v1068, %v634
        %v1090 = vsel %vm1073, %v1069, %v636
        %v1091 = vsel %vm1073, %v1070, %v638
        %v1092 = vsel %vm1073, %v1071, %v640
        %v1093 = vsel %vm1073, %v1072, %v642
        %vm1094 = vcmask 72704
        %v1095 = vsel %vm1094, %v1074, %v684
        %v1096 = vsel %vm1094, %v1075, %v686
        %v1097 = vsel %vm1094, %v1076, %v688
        %v1098 = vsel %vm1094, %v1077, %v690
        %v1099 = vsel %vm1094, %v1078, %v692
        %v1100 = vsel %vm1094, %v1079, %v694
        %v1101 = vsel %vm1094, %v1080, %v696
        %v1102 = vsel %vm1094, %v1081, %v698
        %v1103 = vsel %vm1094, %v1082, %v700
        %v1104 = vsel %vm1094, %v1083, %v702
        %v1105 = vsel %vm1094, %v1084, %v704
        %v1106 = vsel %vm1094, %v1085, %v706
        %v1107 = vsel %vm1094, %v1086, %v708
        %v1108 = vsel %vm1094, %v1087, %v710
        %v1109 = vsel %vm1094, %v1088, %v712
        %v1110 = vsel %vm1094, %v1089, %v714
        %v1111 = vsel %vm1094, %v1090, %v716
        %v1112 = vsel %vm1094, %v1091, %v718
        %v1113 = vsel %vm1094, %v1092, %v720
        %v1114 = vsel %vm1094, %v1093, %v722
        %vm1115 = vcmask 97280
        %v1116 = vsel %vm1115, %v1095, %v746
        %v1117 = vsel %vm1115, %v1096, %v748
        %v1118 = vsel %vm1115, %v1097, %v750
        %v1119 = vsel %vm1115, %v1098, %v752
        %v1120 = vsel %vm1115, %v1099, %v754
        %v1121 = vsel %vm1115, %v1100, %v756
        %v1122 = vsel %vm1115, %v1101, %v758
        %v1123 = vsel %vm1115, %v1102, %v760
        %v1124 = vsel %vm1115, %v1103, %v762
        %v1125 = vsel %vm1115, %v1104, %v764
        %v1126 = vsel %vm1115, %v1105, %v766
        %v1127 = vsel %vm1115, %v1106, %v768
        %v1128 = vsel %vm1115, %v1107, %v770
        %v1129 = vsel %vm1115, %v1108, %v772
        %v1130 = vsel %vm1115, %v1109, %v774
        %v1131 = vsel %vm1115, %v1110, %v776
        %v1132 = vsel %vm1115, %v1111, %v778
        %v1133 = vsel %vm1115, %v1112, %v780
        %v1134 = vsel %vm1115, %v1113, %v782
        %v1135 = vsel %vm1115, %v1114, %v784
        %vm1136 = vcmask 121856
        %v1137 = vsel %vm1136, %v1116, %v808
        %v1138 = vsel %vm1136, %v1117, %v810
        %v1139 = vsel %vm1136, %v1118, %v812
        %v1140 = vsel %vm1136, %v1119, %v814
        %v1141 = vsel %vm1136, %v1120, %v816
        %v1142 = vsel %vm1136, %v1121, %v818
        %v1143 = vsel %vm1136, %v1122, %v820
        %v1144 = vsel %vm1136, %v1123, %v822
        %v1145 = vsel %vm1136, %v1124, %v824
        %v1146 = vsel %vm1136, %v1125, %v826
        %v1147 = vsel %vm1136, %v1126, %v828
        %v1148 = vsel %vm1136, %v1127, %v830
        %v1149 = vsel %vm1136, %v1128, %v832
        %v1150 = vsel %vm1136, %v1129, %v834
        %v1151 = vsel %vm1136, %v1130, %v836
        %v1152 = vsel %vm1136, %v1131, %v838
        %v1153 = vsel %vm1136, %v1132, %v840
        %v1154 = vsel %vm1136, %v1133, %v842
        %v1155 = vsel %vm1136, %v1134, %v844
        %v1156 = vsel %vm1136, %v1135, %v846
        %vm1157 = vcmask 146432
        %v1158 = vsel %vm1157, %v1137, %v870
        %v1159 = vsel %vm1157, %v1138, %v872
        %v1160 = vsel %vm1157, %v1139, %v874
        %v1161 = vsel %vm1157, %v1140, %v876
        %v1162 = vsel %vm1157, %v1141, %v878
        %v1163 = vsel %vm1157, %v1142, %v880
        %v1164 = vsel %vm1157, %v1143, %v882
        %v1165 = vsel %vm1157, %v1144, %v884
        %v1166 = vsel %vm1157, %v1145, %v886
        %v1167 = vsel %vm1157, %v1146, %v888
        %v1168 = vsel %vm1157, %v1147, %v890
        %v1169 = vsel %vm1157, %v1148, %v892
        %v1170 = vsel %vm1157, %v1149, %v894
        %v1171 = vsel %vm1157, %v1150, %v896
        %v1172 = vsel %vm1157, %v1151, %v898
        %v1173 = vsel %vm1157, %v1152, %v900
        %v1174 = vsel %vm1157, %v1153, %v902
        %v1175 = vsel %vm1157, %v1154, %v904
        %v1176 = vsel %vm1157, %v1155, %v906
        %v1177 = vsel %vm1157, %v1156, %v908
        %vm1178 = vcmask 171008
        %v1179 = vsel %vm1178, %v1158, %v932
        %v1180 = vsel %vm1178, %v1159, %v934
        %v1181 = vsel %vm1178, %v1160, %v936
        %v1182 = vsel %vm1178, %v1161, %v938
        %v1183 = vsel %vm1178, %v1162, %v940
        %v1184 = vsel %vm1178, %v1163, %v942
        %v1185 = vsel %vm1178, %v1164, %v944
        %v1186 = vsel %vm1178, %v1165, %v946
        %v1187 = vsel %vm1178, %v1166, %v948
        %v1188 = vsel %vm1178, %v1167, %v950
        %v1189 = vsel %vm1178, %v1168, %v952
        %v1190 = vsel %vm1178, %v1169, %v954
        %v1191 = vsel %vm1178, %v1170, %v956
        %v1192 = vsel %vm1178, %v1171, %v958
        %v1193 = vsel %vm1178, %v1172, %v960
        %v1194 = vsel %vm1178, %v1173, %v962
        %v1195 = vsel %vm1178, %v1174, %v964
        %v1196 = vsel %vm1178, %v1175, %v966
        %v1197 = vsel %vm1178, %v1176, %v968
        %v1198 = vsel %vm1178, %v1177, %v970
        %vm1199 = vcmask 195584
        %v1200 = vsel %vm1199, %v1179, %v994
        %v1201 = vsel %vm1199, %v1180, %v996
        %v1202 = vsel %vm1199, %v1181, %v998
        %v1203 = vsel %vm1199, %v1182, %v1000
        %v1204 = vsel %vm1199, %v1183, %v1002
        %v1205 = vsel %vm1199, %v1184, %v1004
        %v1206 = vsel %vm1199, %v1185, %v1006
        %v1207 = vsel %vm1199, %v1186, %v1008
        %v1208 = vsel %vm1199, %v1187, %v1010
        %v1209 = vsel %vm1199, %v1188, %v1012
        %v1210 = vsel %vm1199, %v1189, %v1014
        %v1211 = vsel %vm1199, %v1190, %v1016
        %v1212 = vsel %vm1199, %v1191, %v1018
        %v1213 = vsel %vm1199, %v1192, %v1020
        %v1214 = vsel %vm1199, %v1193, %v1022
        %v1215 = vsel %vm1199, %v1194, %v1024
        %v1216 = vsel %vm1199, %v1195, %v1026
        %v1217 = vsel %vm1199, %v1196, %v1028
        %v1218 = vsel %vm1199, %v1197, %v1030
        %v1219 = vsel %vm1199, %v1198, %v1032
        %v1220 = vpack.c.bf16 %v1201, %v1200
        %v1221 = vpack.c.bf16 %v1203, %v1202
        %v1222 = vpack.c.bf16 %v1205, %v1204
        %v1223 = vpack.c.bf16 %v1207, %v1206
        %v1224 = vpack.c.bf16 %v1209, %v1208
        %v1225 = vpack.c.bf16 %v1211, %v1210
        %v1226 = vpack.c.bf16 %v1213, %v1212
        %v1227 = vpack.c.bf16 %v1215, %v1214
        %v1228 = vpack.c.bf16 %v1217, %v1216
        %v1229 = vpack.c.bf16 %v1219, %v1218
        %v1230 = vld [vmem:[%s1] sm:$0xf]
        %v1231 = vld [vmem:[%s1 + $0x4] sm:$0xf]
        %v1232 = vld [vmem:[%s1 + $0x8] sm:$0xf]
        %v1233 = vld [vmem:[%s1 + $0xc] sm:$0x3]
        %v1234 = vld [vmem:[%s2] sm:$0x1]
        %v1236 = vlaneseq
        %v1237 = vshrl.u32 %v1236, 7
        %v1238 = vsub.s32 0, %v1237
        %v1239 = vrot.slane %v1234, %v1238
        %v1245 = vunpack.c.l.b16 %v1230
        %v1246 = vunpack.c.l.b16 %v1231
        %v1247 = vunpack.c.l.b16 %v1232
        %v1248 = vunpack.c.l.b16 %v1233
        %v1249 = vpack.c.b16 %v1246, %v1245
        %v1250 = vpack.c.b16 %v1248, %v1247
        %vm1252 = vcmask 220160
        %v1254 = vsel %vm1252, %v1220, 0
        %v1257 = vsel %vm1252, %v1221, 0
        %v1260 = vsel %vm1252, %v1222, 0
        %v1263 = vsel %vm1252, %v1223, 0
        %v1266 = vsel %vm1252, %v1224, 0
        %v1269 = vsel %vm1252, %v1225, 0
        %v1272 = vsel %vm1252, %v1226, 0
        %v1275 = vsel %vm1252, %v1227, 0
        %v1278 = vsel %vm1252, %v1228, 0
        %v1281 = vsel %vm1252, %v1229, 0
        %vm1283 = vcmask 1044480
        %vm1284 = vcmask 1045504
        %v1285 = vsel %vm1283, 4294967295, 65535
        %v1286 = vsel %vm1284, %v1285, 0
        %v1288 = vand.u32 %v1250, %v1286
        %1290 = vmatprep.subr.bf16.mxu0 0
        %1291 = vmatpush1.bf16.msra.mxu0 %v1249
        %1292 = vmatprep.subr.bf16.mxu0 0
        %1293 = vmatpush1.bf16.msra.mxu0 %v1288
        %1294 = vmatprep.subr.bf16.mxu0 0
        %1295 = vmatpush1.bf16.msra.mxu0 0
        %1296 = vmatprep.subr.bf16.mxu0 0
        %1297 = vmatpush1.bf16.msra.mxu0 0
        %1298 = vmatprep.subr.bf16.mxu0 0
        %1299 = vmatpush1.bf16.msra.mxu0 0
        %1300 = vmatprep.subr.bf16.mxu0 0
        %1301 = vmatpush1.bf16.msra.mxu0 0
        %1302 = vmatprep.subr.bf16.mxu0 0
        %1303 = vmatpush1.bf16.msra.mxu0 0
        %1304 = vmatprep.subr.bf16.mxu0 0
        %1305 = vmatpush1.bf16.msra.mxu0 0
        %1306 = vmatprep.subr.bf16.mxu0 0
        %1307 = vmatpush1.bf16.msra.mxu0 0
        %1308 = vmatprep.subr.bf16.mxu0 0
        %1309 = vmatpush1.bf16.msra.mxu0 0
        %1310 = vmatprep.subr.bf16.mxu0 0
        %1311 = vmatpush1.bf16.msra.mxu0 0
        %1312 = vmatprep.subr.bf16.mxu0 0
        %1313 = vmatpush1.bf16.msra.mxu0 0
        %1314 = vmatprep.subr.bf16.mxu0 0
        %1315 = vmatpush1.bf16.msra.mxu0 0
        %1316 = vmatprep.subr.bf16.mxu0 0
        %1317 = vmatpush1.bf16.msra.mxu0 0
        %1318 = vmatprep.subr.bf16.mxu0 0
        %1319 = vmatpush1.bf16.msra.mxu0 0
        %1320 = vmatprep.subr.bf16.mxu0 0
        %1321 = vmatpush1.bf16.msra.mxu0 0
        %1322 = vmatprep.mubr.bf16.mxu0 0
        %1323 = vmatmul.mubr.bf16.gmra.mrb[0].mxu0 %v1254
        %v1324 = vpop.f32.mrb[0].mxu0
        %v1325 = vpop.f32.mrb[0].mxu0
        %v1326 = vpop.f32.mrb[0].mxu0
        %v1327 = vpop.f32.mrb[0].mxu0
        %1328 = vmatprep.mubr.bf16.mxu0 0
        %1329 = vmatmul.mubr.bf16.gmra.mrb[0].mxu0 %v1257
        %v1330 = vpop.f32.mrb[0].mxu0
        %v1331 = vadd.f32 %v1239, %v1330
        %v1332 = vpop.f32.mrb[0].mxu0
        %v1333 = vpop.f32.mrb[0].mxu0
        %v1334 = vadd.f32 %v1239, %v1333
        %v1335 = vpop.f32.mrb[0].mxu0
        %1336 = vmatprep.mubr.bf16.mxu0 0
        %1337 = vmatmul.mubr.bf16.gmra.mrb[0].mxu0 %v1260
        %v1338 = vpop.f32.mrb[0].mxu0
        %v1339 = vadd.f32 %v1239, %v1338
        %v1340 = vpop.f32.mrb[0].mxu0
        %v1341 = vpop.f32.mrb[0].mxu0
        %v1342 = vadd.f32 %v1239, %v1341
        %v1343 = vpop.f32.mrb[0].mxu0
        %1344 = vmatprep.mubr.bf16.mxu0 0
        %1345 = vmatmul.mubr.bf16.gmra.mrb[0].mxu0 %v1263
        %v1346 = vpop.f32.mrb[0].mxu0
        %v1347 = vadd.f32 %v1239, %v1346
        %v1348 = vpop.f32.mrb[0].mxu0
        %v1349 = vpop.f32.mrb[0].mxu0
        %v1350 = vadd.f32 %v1239, %v1349
        %v1351 = vpop.f32.mrb[0].mxu0
        %1352 = vmatprep.mubr.bf16.mxu0 0
        %1353 = vmatmul.mubr.bf16.gmra.mrb[0].mxu0 %v1266
        %v1354 = vpop.f32.mrb[0].mxu0
        %v1355 = vadd.f32 %v1239, %v1354
        %v1356 = vpop.f32.mrb[0].mxu0
        %v1357 = vpop.f32.mrb[0].mxu0
        %v1358 = vadd.f32 %v1239, %v1357
        %v1359 = vpop.f32.mrb[0].mxu0
        %1360 = vmatprep.mubr.bf16.mxu0 0
        %1361 = vmatmul.mubr.bf16.gmra.mrb[0].mxu0 %v1269
        %v1362 = vpop.f32.mrb[0].mxu0
        %v1363 = vadd.f32 %v1239, %v1362
        %v1364 = vpop.f32.mrb[0].mxu0
        %v1365 = vpop.f32.mrb[0].mxu0
        %v1366 = vadd.f32 %v1239, %v1365
        %v1367 = vpop.f32.mrb[0].mxu0
        %1368 = vmatprep.mubr.bf16.mxu0 0
        %1369 = vmatmul.mubr.bf16.gmra.mrb[0].mxu0 %v1272
        %v1370 = vpop.f32.mrb[0].mxu0
        %v1371 = vadd.f32 %v1239, %v1370
        %v1372 = vpop.f32.mrb[0].mxu0
        %v1373 = vpop.f32.mrb[0].mxu0
        %v1374 = vadd.f32 %v1239, %v1373
        %v1375 = vpop.f32.mrb[0].mxu0
        %1376 = vmatprep.mubr.bf16.mxu0 0
        %1377 = vmatmul.mubr.bf16.gmra.mrb[0].mxu0 %v1275
        %v1378 = vpop.f32.mrb[0].mxu0
        %v1379 = vadd.f32 %v1239, %v1378
        %v1380 = vpop.f32.mrb[0].mxu0
        %v1381 = vpop.f32.mrb[0].mxu0
        %v1382 = vadd.f32 %v1239, %v1381
        %v1383 = vpop.f32.mrb[0].mxu0
        %1384 = vmatprep.mubr.bf16.mxu0 0
        %1385 = vmatmul.mubr.bf16.gmra.mrb[0].mxu0 %v1278
        %v1386 = vpop.f32.mrb[0].mxu0
        %v1387 = vadd.f32 %v1239, %v1386
        %v1388 = vpop.f32.mrb[0].mxu0
        %v1389 = vpop.f32.mrb[0].mxu0
        %v1390 = vadd.f32 %v1239, %v1389
        %v1391 = vpop.f32.mrb[0].mxu0
        %1392 = vmatprep.mubr.bf16.mxu0 0
        %1393 = vmatmul.mubr.bf16.gmra.mrb[0].mxu0 %v1281
        %v1394 = vpop.f32.mrb[0].mxu0
        %v1395 = vpop.f32.mrb[0].mxu0
        %v1396 = vpop.f32.mrb[0].mxu0
        %v1397 = vpop.f32.mrb[0].mxu0
        %1398 = vdwg.mxu0
        %v1399 = vmax.f32 %v1331, 0.0
        %v1400 = vmax.f32 %v1334, 0.0
        %v1401 = vmax.f32 %v1339, 0.0
        %v1402 = vmax.f32 %v1342, 0.0
        %v1403 = vmax.f32 %v1347, 0.0
        %v1404 = vmax.f32 %v1350, 0.0
        %v1405 = vmax.f32 %v1355, 0.0
        %v1406 = vmax.f32 %v1358, 0.0
        %v1407 = vmax.f32 %v1363, 0.0
        %v1408 = vmax.f32 %v1366, 0.0
        %v1409 = vmax.f32 %v1371, 0.0
        %v1410 = vmax.f32 %v1374, 0.0
        %v1411 = vmax.f32 %v1379, 0.0
        %v1412 = vmax.f32 %v1382, 0.0
        %v1413 = vmax.f32 %v1387, 0.0
        %v1414 = vmax.f32 %v1390, 0.0
        %vm1423 = vcmask 1046528
        %v1424 = vrot.slane %v1399, 1
        %v1425 = vrot.slane %v1400, 1
        %v1426 = vsel %vm1423, %v1424, %v1425
        %v1427 = vrot.slane %v1403, 1
        %v1428 = vrot.slane %v1404, 1
        %v1429 = vsel %vm1423, %v1427, %v1428
        %v1430 = vrot.slane %v1407, 1
        %v1431 = vrot.slane %v1408, 1
        %v1432 = vsel %vm1423, %v1430, %v1431
        %v1433 = vrot.slane %v1411, 1
        %v1434 = vrot.slane %v1412, 1
        %v1435 = vsel %vm1423, %v1433, %v1434
        %v1440 = vmax.f32 %v1399, %v1426
        %v1441 = vmax.f32 %v1403, %v1429
        %v1442 = vmax.f32 %v1407, %v1432
        %v1443 = vmax.f32 %v1411, %v1435
        %v1452 = vrot.slane %v1401, 1
        %v1453 = vrot.slane %v1402, 1
        %v1454 = vsel %vm1423, %v1452, %v1453
        %v1455 = vrot.slane %v1405, 1
        %v1456 = vrot.slane %v1406, 1
        %v1457 = vsel %vm1423, %v1455, %v1456
        %v1458 = vrot.slane %v1409, 1
        %v1459 = vrot.slane %v1410, 1
        %v1460 = vsel %vm1423, %v1458, %v1459
        %v1461 = vrot.slane %v1413, 1
        %v1462 = vrot.slane %v1414, 1
        %v1463 = vsel %vm1423, %v1461, %v1462
        %v1468 = vmax.f32 %v1401, %v1454
        %v1469 = vmax.f32 %v1405, %v1457
        %v1470 = vmax.f32 %v1409, %v1460
        %v1471 = vmax.f32 %v1413, %v1463
        %v1472 = vmax.f32 %v1440, %v1468
        %v1473 = vmax.f32 %v1441, %v1469
        %v1474 = vmax.f32 %v1442, %v1470
        %v1475 = vmax.f32 %v1443, %v1471
        %vm1476 = vcmask 123905
        %1477 = vst.msk [vmem:[#allocation3 + $0x18] sm:$0x2] %vm1476, %v1472
        %vm1478 = vcmask 125955
        %1479 = vst.msk [vmem:[#allocation3 + $0x17] sm:$0x8] %vm1478, %v1472
        %vm1480 = vcmask 128005
        %1481 = vst.msk [vmem:[#allocation3 + $0x16] sm:$0x20] %vm1480, %v1472
        %vm1482 = vcmask 130055
        %1483 = vst.msk [vmem:[#allocation3 + $0x15] sm:$0x80] %vm1482, %v1472
        %1484 = vst.msk [vmem:[#allocation3 + $0x20] sm:$0x2] %vm1476, %v1473
        %1485 = vst.msk [vmem:[#allocation3 + $0x1f] sm:$0x8] %vm1478, %v1473
        %1486 = vst.msk [vmem:[#allocation3 + $0x1e] sm:$0x20] %vm1480, %v1473
        %1487 = vst.msk [vmem:[#allocation3 + $0x1d] sm:$0x80] %vm1482, %v1473
        %1488 = vst.msk [vmem:[#allocation3 + $0x28] sm:$0x2] %vm1476, %v1474
        %1489 = vst.msk [vmem:[#allocation3 + $0x27] sm:$0x8] %vm1478, %v1474
        %1490 = vst.msk [vmem:[#allocation3 + $0x26] sm:$0x20] %vm1480, %v1474
        %1491 = vst.msk [vmem:[#allocation3 + $0x25] sm:$0x80] %vm1482, %v1474
        %1492 = vst.msk [vmem:[#allocation3 + $0x30] sm:$0x2] %vm1476, %v1475
        %1493 = vst.msk [vmem:[#allocation3 + $0x2f] sm:$0x8] %vm1478, %v1475
        %1494 = vst.msk [vmem:[#allocation3 + $0x2e] sm:$0x20] %vm1480, %v1475
        %1495 = vst.msk [vmem:[#allocation3 + $0x2d] sm:$0x80] %vm1482, %v1475
        %v1496 = vld [vmem:[#allocation3 + $0x7] sm:$0xff]
        %v1497 = vld [vmem:[#allocation3 + $0xf] sm:$0xff]
        %v1498 = vld [vmem:[#allocation3 + $0x17] sm:$0xff]
        %v1499 = vld [vmem:[#allocation3 + $0x1f] sm:$0xff]
        %v1500 = vld [vmem:[#allocation3 + $0x27] sm:$0xff]
        %v1501 = vld [vmem:[#allocation3 + $0x2f] sm:$0xff]
        %v1502 = vld [vmem:[#allocation3 + $0x8] sm:$0xff]
        %v1503 = vld [vmem:[#allocation3 + $0x10] sm:$0xff]
        %v1504 = vld [vmem:[#allocation3 + $0x18] sm:$0xff]
        %v1505 = vld [vmem:[#allocation3 + $0x20] sm:$0xff]
        %v1506 = vld [vmem:[#allocation3 + $0x28] sm:$0xff]
        %v1507 = vld [vmem:[#allocation3 + $0x30] sm:$0xff]
        %v1508 = vld [vmem:[#allocation3 + $0x9] sm:$0xff]
        %v1509 = vld [vmem:[#allocation3 + $0x11] sm:$0xff]
        %v1510 = vld [vmem:[#allocation3 + $0x19] sm:$0xff]
        %v1511 = vld [vmem:[#allocation3 + $0x21] sm:$0xff]
        %v1512 = vld [vmem:[#allocation3 + $0x29] sm:$0xff]
        %v1513 = vld [vmem:[#allocation3 + $0x31] sm:$0xff]
        %v1514 = vld [vmem:[#allocation3 + $0x37] sm:$0xff]
        %v1515 = vld [vmem:[#allocation3 + $0x38] sm:$0xff]
        %v1516 = vld [vmem:[#allocation3 + $0x39] sm:$0xff]
        %v1517 = vld [vmem:[#allocation3 + $0x3f] sm:$0xff]
        %v1518 = vld [vmem:[#allocation3 + $0x40] sm:$0xff]
        %v1519 = vld [vmem:[#allocation3 + $0x41] sm:$0xff]
        %1526 = vrot.lane.b32.xlu0 %v1502, 16
        %v1527 = vpop.permute.xlu0 %1526
        %1528 = vrot.lane.b32.xlu0 %v1503, 16
        %v1529 = vpop.permute.xlu0 %1528
        %1530 = vrot.lane.b32.xlu0 %v1504, 16
        %v1531 = vpop.permute.xlu0 %1530
        %1532 = vrot.lane.b32.xlu0 %v1505, 16
        %v1533 = vpop.permute.xlu0 %1532
        %1534 = vrot.lane.b32.xlu0 %v1506, 16
        %v1535 = vpop.permute.xlu0 %1534
        %1536 = vrot.lane.b32.xlu0 %v1507, 16
        %v1537 = vpop.permute.xlu0 %1536
        %1550 = vrot.lane.b32.xlu0 %v1508, 32
        %v1551 = vpop.permute.xlu0 %1550
        %1552 = vrot.lane.b32.xlu0 %v1509, 32
        %v1553 = vpop.permute.xlu0 %1552
        %1554 = vrot.lane.b32.xlu0 %v1510, 32
        %v1555 = vpop.permute.xlu0 %1554
        %1556 = vrot.lane.b32.xlu0 %v1511, 32
        %v1557 = vpop.permute.xlu0 %1556
        %1558 = vrot.lane.b32.xlu0 %v1512, 32
        %v1559 = vpop.permute.xlu0 %1558
        %1560 = vrot.lane.b32.xlu0 %v1513, 32
        %v1561 = vpop.permute.xlu0 %1560
        %1574 = vrot.lane.b32.xlu0 %v1497, 48
        %v1575 = vpop.permute.xlu0 %1574
        %1576 = vrot.lane.b32.xlu0 %v1498, 48
        %v1577 = vpop.permute.xlu0 %1576
        %1578 = vrot.lane.b32.xlu0 %v1499, 48
        %v1579 = vpop.permute.xlu0 %1578
        %1580 = vrot.lane.b32.xlu0 %v1500, 48
        %v1581 = vpop.permute.xlu0 %1580
        %1582 = vrot.lane.b32.xlu0 %v1501, 48
        %v1583 = vpop.permute.xlu0 %1582
        %1584 = vrot.lane.b32.xlu0 %v1514, 48
        %v1585 = vpop.permute.xlu0 %1584
        %1593 = vrot.lane.b32.xlu0 %v1503, 64
        %v1594 = vpop.permute.xlu0 %1593
        %1595 = vrot.lane.b32.xlu0 %v1504, 64
        %v1596 = vpop.permute.xlu0 %1595
        %1597 = vrot.lane.b32.xlu0 %v1505, 64
        %v1598 = vpop.permute.xlu0 %1597
        %1599 = vrot.lane.b32.xlu0 %v1506, 64
        %v1600 = vpop.permute.xlu0 %1599
        %1601 = vrot.lane.b32.xlu0 %v1507, 64
        %v1602 = vpop.permute.xlu0 %1601
        %1603 = vrot.lane.b32.xlu0 %v1515, 64
        %v1604 = vpop.permute.xlu0 %1603
        %1612 = vrot.lane.b32.xlu0 %v1509, 80
        %v1613 = vpop.permute.xlu0 %1612
        %1614 = vrot.lane.b32.xlu0 %v1510, 80
        %v1615 = vpop.permute.xlu0 %1614
        %1616 = vrot.lane.b32.xlu0 %v1511, 80
        %v1617 = vpop.permute.xlu0 %1616
        %1618 = vrot.lane.b32.xlu0 %v1512, 80
        %v1619 = vpop.permute.xlu0 %1618
        %1620 = vrot.lane.b32.xlu0 %v1513, 80
        %v1621 = vpop.permute.xlu0 %1620
        %1622 = vrot.lane.b32.xlu0 %v1516, 80
        %v1623 = vpop.permute.xlu0 %1622
        %1631 = vrot.lane.b32.xlu0 %v1498, 96
        %v1632 = vpop.permute.xlu0 %1631
        %1633 = vrot.lane.b32.xlu0 %v1499, 96
        %v1634 = vpop.permute.xlu0 %1633
        %1635 = vrot.lane.b32.xlu0 %v1500, 96
        %v1636 = vpop.permute.xlu0 %1635
        %1637 = vrot.lane.b32.xlu0 %v1501, 96
        %v1638 = vpop.permute.xlu0 %1637
        %1639 = vrot.lane.b32.xlu0 %v1514, 96
        %v1640 = vpop.permute.xlu0 %1639
        %1641 = vrot.lane.b32.xlu0 %v1517, 96
        %v1642 = vpop.permute.xlu0 %1641
        %1650 = vrot.lane.b32.xlu0 %v1504, 112
        %v1651 = vpop.permute.xlu0 %1650
        %1652 = vrot.lane.b32.xlu0 %v1505, 112
        %v1653 = vpop.permute.xlu0 %1652
        %1654 = vrot.lane.b32.xlu0 %v1506, 112
        %v1655 = vpop.permute.xlu0 %1654
        %1656 = vrot.lane.b32.xlu0 %v1507, 112
        %v1657 = vpop.permute.xlu0 %1656
        %1658 = vrot.lane.b32.xlu0 %v1515, 112
        %v1659 = vpop.permute.xlu0 %1658
        %1660 = vrot.lane.b32.xlu0 %v1518, 112
        %v1661 = vpop.permute.xlu0 %1660
        %v1668 = vsel %vm395, %v1496, %v1527
        %v1669 = vsel %vm395, %v1497, %v1529
        %v1670 = vsel %vm395, %v1498, %v1531
        %v1671 = vsel %vm395, %v1499, %v1533
        %v1672 = vsel %vm395, %v1500, %v1535
        %v1673 = vsel %vm395, %v1501, %v1537
        %v1674 = vsel %vm406, %v1668, %v1551
        %v1675 = vsel %vm406, %v1669, %v1553
        %v1676 = vsel %vm406, %v1670, %v1555
        %v1677 = vsel %vm406, %v1671, %v1557
        %v1678 = vsel %vm406, %v1672, %v1559
        %v1679 = vsel %vm406, %v1673, %v1561
        %vm1680 = vcmask 392192
        %v1681 = vsel %vm1680, %v1674, %v1575
        %v1682 = vsel %vm1680, %v1675, %v1577
        %v1683 = vsel %vm1680, %v1676, %v1579
        %v1684 = vsel %vm1680, %v1677, %v1581
        %v1685 = vsel %vm1680, %v1678, %v1583
        %v1686 = vsel %vm1680, %v1679, %v1585
        %vm1687 = vcmask 523264
        %v1688 = vsel %vm1687, %v1681, %v1594
        %v1689 = vsel %vm1687, %v1682, %v1596
        %v1690 = vsel %vm1687, %v1683, %v1598
        %v1691 = vsel %vm1687, %v1684, %v1600
        %v1692 = vsel %vm1687, %v1685, %v1602
        %v1693 = vsel %vm1687, %v1686, %v1604
        %vm1694 = vcmask 654336
        %v1695 = vsel %vm1694, %v1688, %v1613
        %v1696 = vsel %vm1694, %v1689, %v1615
        %v1697 = vsel %vm1694, %v1690, %v1617
        %v1698 = vsel %vm1694, %v1691, %v1619
        %v1699 = vsel %vm1694, %v1692, %v1621
        %v1700 = vsel %vm1694, %v1693, %v1623
        %vm1701 = vcmask 785408
        %v1702 = vsel %vm1701, %v1695, %v1632
        %v1703 = vsel %vm1701, %v1696, %v1634
        %v1704 = vsel %vm1701, %v1697, %v1636
        %v1705 = vsel %vm1701, %v1698, %v1638
        %v1706 = vsel %vm1701, %v1699, %v1640
        %v1707 = vsel %vm1701, %v1700, %v1642
        %vm1708 = vcmask 916480
        %v1709 = vsel %vm1708, %v1702, %v1651
        %v1710 = vsel %vm1708, %v1703, %v1653
        %v1711 = vsel %vm1708, %v1704, %v1655
        %v1712 = vsel %vm1708, %v1705, %v1657
        %v1713 = vsel %vm1708, %v1706, %v1659
        %v1714 = vsel %vm1708, %v1707, %v1661
        %v1715 = vpack.c.bf16 %v1710, %v1709
        %v1716 = vpack.c.bf16 %v1511, %v1510
        %v1717 = vpack.c.bf16 %v1712, %v1711
        %v1718 = vpack.c.bf16 %v1513, %v1512
        %v1719 = vpack.c.bf16 %v1714, %v1713
        %v1720 = vpack.c.bf16 %v1519, %v1516
        %v1721 = vld [vmem:[%s3] sm:$0xf]
        %v1722 = vld [vmem:[%s3 + $0x4] sm:$0xf]
        %v1723 = vld [vmem:[%s3 + $0x8] sm:$0xf]
        %v1724 = vld [vmem:[%s3 + $0xc] sm:$0xf]
        %v1725 = vld [vmem:[%s3 + $0x10] sm:$0xf]
        %v1726 = vld [vmem:[%s3 + $0x14] sm:$0xf]
        %v1727 = vld [vmem:[%s3 + $0x18] sm:$0xf]
        %v1728 = vld [vmem:[%s3 + $0x1c] sm:$0xf]
        %v1729 = vld [vmem:[%s3 + $0x20] sm:$0xf]
        %v1730 = vld [vmem:[%s3 + $0x24] sm:$0xf]
        %v1731 = vld [vmem:[%s3 + $0x28] sm:$0xf]
        %v1732 = vld [vmem:[%s3 + $0x2c] sm:$0xf]
        %v1733 = vld [vmem:[%s3 + $0x30] sm:$0xf]
        %v1734 = vld [vmem:[%s3 + $0x34] sm:$0xf]
        %v1735 = vld [vmem:[%s3 + $0x38] sm:$0xf]
        %v1736 = vld [vmem:[%s3 + $0x3c] sm:$0xf]
        %v1737 = vld [vmem:[%s3 + $0x40] sm:$0xf]
        %v1738 = vld [vmem:[%s3 + $0x44] sm:$0xf]
        %v1739 = vld [vmem:[%s4] sm:$0x1]
        %v1741 = vlaneseq
        %v1742 = vshrl.u32 %v1741, 7
        %v1743 = vsub.s32 0, %v1742
        %v1744 = vrot.slane %v1739, %v1743
        %v1764 = vunpack.c.l.b16 %v1721
        %v1765 = vunpack.c.l.b16 %v1722
        %v1766 = vunpack.c.l.b16 %v1723
        %v1767 = vunpack.c.l.b16 %v1724
        %v1768 = vunpack.c.l.b16 %v1725
        %v1769 = vunpack.c.l.b16 %v1726
        %v1770 = vunpack.c.l.b16 %v1727
        %v1771 = vunpack.c.l.b16 %v1728
        %v1772 = vunpack.c.l.b16 %v1729
        %v1773 = vunpack.c.l.b16 %v1730
        %v1774 = vunpack.c.l.b16 %v1731
        %v1775 = vunpack.c.l.b16 %v1732
        %v1776 = vunpack.c.l.b16 %v1733
        %v1777 = vunpack.c.l.b16 %v1734
        %v1778 = vunpack.c.l.b16 %v1735
        %v1779 = vunpack.c.l.b16 %v1736
        %v1780 = vunpack.c.l.b16 %v1737
        %v1781 = vunpack.c.l.b16 %v1738
        %v1782 = vpack.c.b16 %v1765, %v1764
        %v1783 = vpack.c.b16 %v1767, %v1766
        %v1784 = vpack.c.b16 %v1769, %v1768
        %v1785 = vpack.c.b16 %v1771, %v1770
        %v1786 = vpack.c.b16 %v1773, %v1772
        %v1787 = vpack.c.b16 %v1775, %v1774
        %v1788 = vpack.c.b16 %v1777, %v1776
        %v1789 = vpack.c.b16 %v1779, %v1778
        %v1790 = vpack.c.b16 %v1781, %v1780
        %v1801 = vsel %vm395, %v1716, 0
        %v1804 = vsel %vm395, %v1718, 0
        %v1807 = vsel %vm395, %v1720, 0
        %1809 = vmatprep.subr.bf16.mxu0 0
        %1810 = vmatpush1.bf16.msra.mxu0 %v1782
        %1811 = vmatprep.subr.bf16.mxu0 0
        %1812 = vmatpush1.bf16.msra.mxu0 %v1783
        %1813 = vmatprep.subr.bf16.mxu0 0
        %1814 = vmatpush1.bf16.msra.mxu0 %v1784
        %1815 = vmatprep.subr.bf16.mxu0 0
        %1816 = vmatpush1.bf16.msra.mxu0 %v1785
        %1817 = vmatprep.subr.bf16.mxu0 0
        %1818 = vmatpush1.bf16.msra.mxu0 %v1786
        %1819 = vmatprep.subr.bf16.mxu0 0
        %1820 = vmatpush1.bf16.msra.mxu0 %v1787
        %1821 = vmatprep.subr.bf16.mxu0 0
        %1822 = vmatpush1.bf16.msra.mxu0 %v1788
        %1823 = vmatprep.subr.bf16.mxu0 0
        %1824 = vmatpush1.bf16.msra.mxu0 %v1789
        %1825 = vmatprep.subr.bf16.mxu0 0
        %1826 = vmatpush1.bf16.msra.mxu0 %v1790
        %1827 = vmatprep.subr.bf16.mxu0 0
        %1828 = vmatpush1.bf16.msra.mxu0 0
        %1829 = vmatprep.subr.bf16.mxu0 0
        %1830 = vmatpush1.bf16.msra.mxu0 0
        %1831 = vmatprep.subr.bf16.mxu0 0
        %1832 = vmatpush1.bf16.msra.mxu0 0
        %1833 = vmatprep.subr.bf16.mxu0 0
        %1834 = vmatpush1.bf16.msra.mxu0 0
        %1835 = vmatprep.subr.bf16.mxu0 0
        %1836 = vmatpush1.bf16.msra.mxu0 0
        %1837 = vmatprep.subr.bf16.mxu0 0
        %1838 = vmatpush1.bf16.msra.mxu0 0
        %1839 = vmatprep.subr.bf16.mxu0 0
        %1840 = vmatpush1.bf16.msra.mxu0 0
        %1841 = vmatprep.mubr.bf16.mxu0 %v1801
        %1842 = vmatmul.mubr.bf16.gmra.mrb[0].mxu0 %v1715
        %v1843 = vpop.f32.mrb[0].mxu0
        %v1844 = vpop.f32.mrb[0].mxu0
        %v1845 = vpop.f32.mrb[0].mxu0
        %v1846 = vadd.f32 %v1744, %v1845
        %v1847 = vpop.f32.mrb[0].mxu0
        %1848 = vmatprep.mubr.bf16.mxu0 %v1804
        %1849 = vmatmul.mubr.bf16.gmra.mrb[0].mxu0 %v1717
        %v1850 = vpop.f32.mrb[0].mxu0
        %v1851 = vadd.f32 %v1744, %v1850
        %v1852 = vpop.f32.mrb[0].mxu0
        %v1853 = vpop.f32.mrb[0].mxu0
        %v1854 = vadd.f32 %v1744, %v1853
        %v1855 = vpop.f32.mrb[0].mxu0
        %1856 = vmatprep.mubr.bf16.mxu0 %v1807
        %1857 = vmatmul.mubr.bf16.gmra.mrb[0].mxu0 %v1719
        %v1858 = vpop.f32.mrb[0].mxu0
        %v1859 = vadd.f32 %v1744, %v1858
        %v1860 = vpop.f32.mrb[0].mxu0
        %v1861 = vpop.f32.mrb[0].mxu0
        %v1862 = vadd.f32 %v1744, %v1861
        %v1863 = vpop.f32.mrb[0].mxu0
        %1864 = vdwg.mxu0
        %v1865 = vmax.f32 %v1846, 0.0
        %v1866 = vmax.f32 %v1851, 0.0
        %v1867 = vmax.f32 %v1854, 0.0
        %v1868 = vmax.f32 %v1859, 0.0
        %v1869 = vmax.f32 %v1862, 0.0
        %v1874 = vrot.slane %v1865, 1
        %v1875 = vrot.slane %v1866, 1
        %v1876 = vsel %vm1423, %v1874, %v1875
        %v1877 = vrot.slane %v1867, 1
        %v1878 = vrot.slane %v1868, 1
        %v1879 = vsel %vm1423, %v1877, %v1878
        %v1882 = vmax.f32 %v1865, %v1876
        %v1883 = vmax.f32 %v1867, %v1879
        %v1885 = vsel %vm1423, %v1875, %v1877
        %v1886 = vrot.slane %v1869, 1
        %v1887 = vsel %vm1423, %v1878, %v1886
        %v1890 = vmax.f32 %v1866, %v1885
        %v1891 = vmax.f32 %v1868, %v1887
        %v1892 = vmax.f32 %v1882, %v1890
        %v1893 = vmax.f32 %v1883, %v1891
        %vm1894 = vcmask 254977
        %1895 = vst.msk [vmem:[#allocation4 + $0x18] sm:$0x2] %vm1894, %v1892
        %vm1896 = vcmask 257027
        %1897 = vst.msk [vmem:[#allocation4 + $0x17] sm:$0x8] %vm1896, %v1892
        %1898 = vst.msk [vmem:[#allocation4 + $0x20] sm:$0x2] %vm1894, %v1893
        %1899 = vst.msk [vmem:[#allocation4 + $0x1f] sm:$0x8] %vm1896, %v1893
        %v1900 = vld [vmem:[#allocation4 + $0x7] sm:$0xff]
        %v1901 = vld [vmem:[#allocation4 + $0xf] sm:$0xff]
        %v1902 = vld [vmem:[#allocation4 + $0x17] sm:$0xff]
        %v1903 = vld [vmem:[#allocation4 + $0x1f] sm:$0xff]
        %v1904 = vld [vmem:[#allocation4 + $0x8] sm:$0xff]
        %v1905 = vld [vmem:[#allocation4 + $0x10] sm:$0xff]
        %v1906 = vld [vmem:[#allocation4 + $0x18] sm:$0xff]
        %v1907 = vld [vmem:[#allocation4 + $0x20] sm:$0xff]
        %v1908 = vld [vmem:[#allocation4 + $0x9] sm:$0xff]
        %v1909 = vld [vmem:[#allocation4 + $0x11] sm:$0xff]
        %v1910 = vld [vmem:[#allocation4 + $0x19] sm:$0xff]
        %v1911 = vld [vmem:[#allocation4 + $0x21] sm:$0xff]
        %v1912 = vld [vmem:[#allocation4 + $0x27] sm:$0xff]
        %v1913 = vld [vmem:[#allocation4 + $0x28] sm:$0xff]
        %v1914 = vld [vmem:[#allocation4 + $0x29] sm:$0xff]
        %v1915 = vld [vmem:[#allocation4 + $0x2f] sm:$0xff]
        %v1916 = vld [vmem:[#allocation4 + $0x30] sm:$0xff]
        %v1917 = vld [vmem:[#allocation4 + $0x31] sm:$0xff]
        %1922 = vrot.lane.b32.xlu0 %v1904, 32
        %v1923 = vpop.permute.xlu0 %1922
        %1924 = vrot.lane.b32.xlu0 %v1905, 32
        %v1925 = vpop.permute.xlu0 %1924
        %1926 = vrot.lane.b32.xlu0 %v1906, 32
        %v1927 = vpop.permute.xlu0 %1926
        %1928 = vrot.lane.b32.xlu0 %v1907, 32
        %v1929 = vpop.permute.xlu0 %1928
        %1938 = vrot.lane.b32.xlu0 %v1908, 64
        %v1939 = vpop.permute.xlu0 %1938
        %1940 = vrot.lane.b32.xlu0 %v1909, 64
        %v1941 = vpop.permute.xlu0 %1940
        %1942 = vrot.lane.b32.xlu0 %v1910, 64
        %v1943 = vpop.permute.xlu0 %1942
        %1944 = vrot.lane.b32.xlu0 %v1911, 64
        %v1945 = vpop.permute.xlu0 %1944
        %1954 = vrot.lane.b32.xlu0 %v1901, 96
        %v1955 = vpop.permute.xlu0 %1954
        %1956 = vrot.lane.b32.xlu0 %v1902, 96
        %v1957 = vpop.permute.xlu0 %1956
        %1958 = vrot.lane.b32.xlu0 %v1903, 96
        %v1959 = vpop.permute.xlu0 %1958
        %1960 = vrot.lane.b32.xlu0 %v1912, 96
        %v1961 = vpop.permute.xlu0 %1960
        %1967 = vrot.lane.b32.xlu0 %v1909, 32
        %v1968 = vpop.permute.xlu0 %1967
        %1969 = vrot.lane.b32.xlu0 %v1910, 32
        %v1970 = vpop.permute.xlu0 %1969
        %1971 = vrot.lane.b32.xlu0 %v1911, 32
        %v1972 = vpop.permute.xlu0 %1971
        %1973 = vrot.lane.b32.xlu0 %v1914, 32
        %v1974 = vpop.permute.xlu0 %1973
        %1980 = vrot.lane.b32.xlu0 %v1902, 64
        %v1981 = vpop.permute.xlu0 %1980
        %1982 = vrot.lane.b32.xlu0 %v1903, 64
        %v1983 = vpop.permute.xlu0 %1982
        %1984 = vrot.lane.b32.xlu0 %v1912, 64
        %v1985 = vpop.permute.xlu0 %1984
        %1986 = vrot.lane.b32.xlu0 %v1915, 64
        %v1987 = vpop.permute.xlu0 %1986
        %1994 = vrot.lane.b32.xlu0 %v1906, 96
        %v1995 = vpop.permute.xlu0 %1994
        %1996 = vrot.lane.b32.xlu0 %v1907, 96
        %v1997 = vpop.permute.xlu0 %1996
        %1998 = vrot.lane.b32.xlu0 %v1913, 96
        %v1999 = vpop.permute.xlu0 %1998
        %2000 = vrot.lane.b32.xlu0 %v1916, 96
        %v2001 = vpop.permute.xlu0 %2000
        %v2006 = vsel %vm406, %v1900, %v1923
        %v2007 = vsel %vm406, %v1901, %v1925
        %v2008 = vsel %vm406, %v1902, %v1927
        %v2009 = vsel %vm406, %v1903, %v1929
        %v2010 = vsel %vm1687, %v2006, %v1939
        %v2011 = vsel %vm1687, %v2007, %v1941
        %v2012 = vsel %vm1687, %v2008, %v1943
        %v2013 = vsel %vm1687, %v2009, %v1945
        %v2014 = vsel %vm1701, %v2010, %v1955
        %v2015 = vsel %vm1701, %v2011, %v1957
        %v2016 = vsel %vm1701, %v2012, %v1959
        %v2017 = vsel %vm1701, %v2013, %v1961
        %v2018 = vsel %vm406, %v1905, %v1968
        %v2019 = vsel %vm406, %v1906, %v1970
        %v2020 = vsel %vm406, %v1907, %v1972
        %v2021 = vsel %vm406, %v1913, %v1974
        %v2022 = vsel %vm1687, %v2018, %v1981
        %v2023 = vsel %vm1687, %v2019, %v1983
        %v2024 = vsel %vm1687, %v2020, %v1985
        %v2025 = vsel %vm1687, %v2021, %v1987
        %v2026 = vsel %vm1701, %v2022, %v1995
        %v2027 = vsel %vm1701, %v2023, %v1997
        %v2028 = vsel %vm1701, %v2024, %v1999
        %v2029 = vsel %vm1701, %v2025, %v2001
        %v2030 = vpack.c.bf16 %v2015, %v2014
        %v2031 = vpack.c.bf16 %v2027, %v2026
        %v2032 = vpack.c.bf16 %v1911, %v1910
        %v2033 = vpack.c.bf16 %v2017, %v2016
        %v2034 = vpack.c.bf16 %v2029, %v2028
        %v2035 = vpack.c.bf16 %v1917, %v1914
        %v2036 = vld [vmem:[%s5] sm:$0xf]
        %v2037 = vld [vmem:[%s5 + $0x4] sm:$0xf]
        %v2038 = vld [vmem:[%s5 + $0x8] sm:$0xf]
        %v2039 = vld [vmem:[%s5 + $0xc] sm:$0xf]
        %v2040 = vld [vmem:[%s5 + $0x10] sm:$0xf]
        %v2041 = vld [vmem:[%s5 + $0x14] sm:$0xf]
        %v2042 = vld [vmem:[%s5 + $0x18] sm:$0xf]
        %v2043 = vld [vmem:[%s5 + $0x1c] sm:$0xf]
        %v2044 = vld [vmem:[%s5 + $0x20] sm:$0xf]
        %v2045 = vld [vmem:[%s5 + $0x24] sm:$0xf]
        %v2046 = vld [vmem:[%s5 + $0x28] sm:$0xf]
        %v2047 = vld [vmem:[%s5 + $0x2c] sm:$0xf]
        %v2048 = vld [vmem:[%s5 + $0x30] sm:$0xf]
        %v2049 = vld [vmem:[%s5 + $0x34] sm:$0xf]
        %v2050 = vld [vmem:[%s5 + $0x38] sm:$0xf]
        %v2051 = vld [vmem:[%s5 + $0x3c] sm:$0xf]
        %v2052 = vld [vmem:[%s5 + $0x40] sm:$0xf]
        %v2053 = vld [vmem:[%s5 + $0x44] sm:$0xf]
        %v2054 = vld [vmem:[%s5 + $0x48] sm:$0xf]
        %v2055 = vld [vmem:[%s5 + $0x4c] sm:$0xf]
        %v2056 = vld [vmem:[%s5 + $0x50] sm:$0xf]
        %v2057 = vld [vmem:[%s5 + $0x54] sm:$0xf]
        %v2058 = vld [vmem:[%s5 + $0x58] sm:$0xf]
        %v2059 = vld [vmem:[%s5 + $0x5c] sm:$0xf]
        %v2060 = vld [vmem:[%s5 + $0x60] sm:$0xf]
        %v2061 = vld [vmem:[%s5 + $0x64] sm:$0xf]
        %v2062 = vld [vmem:[%s5 + $0x68] sm:$0xf]
        %v2063 = vld [vmem:[%s5 + $0x6c] sm:$0xf]
        %v2064 = vld [vmem:[%s5 + $0x70] sm:$0xf]
        %v2065 = vld [vmem:[%s5 + $0x74] sm:$0xf]
        %v2066 = vld [vmem:[%s5 + $0x78] sm:$0xf]
        %v2067 = vld [vmem:[%s5 + $0x7c] sm:$0xf]
        %v2068 = vld [vmem:[%s5 + $0x80] sm:$0xf]
        %v2069 = vld [vmem:[%s5 + $0x84] sm:$0xf]
        %v2070 = vld [vmem:[%s5 + $0x88] sm:$0xf]
        %v2071 = vld [vmem:[%s5 + $0x8c] sm:$0xf]
        %v2072 = vld [vmem:[%s6] sm:$0x1]
        %v2074 = vlaneseq
        %v2075 = vshrl.u32 %v2074, 7
        %v2076 = vsub.s32 0, %v2075
        %v2077 = vrot.slane %v2072, %v2076
        %v2115 = vunpack.c.l.b16 %v2036
        %v2116 = vunpack.c.l.b16 %v2037
        %v2117 = vunpack.c.l.b16 %v2038
        %v2118 = vunpack.c.l.b16 %v2039
        %v2119 = vunpack.c.l.b16 %v2040
        %v2120 = vunpack.c.l.b16 %v2041
        %v2121 = vunpack.c.l.b16 %v2042
        %v2122 = vunpack.c.l.b16 %v2043
        %v2123 = vunpack.c.l.b16 %v2044
        %v2124 = vunpack.c.l.b16 %v2045
        %v2125 = vunpack.c.l.b16 %v2046
        %v2126 = vunpack.c.l.b16 %v2047
        %v2127 = vunpack.c.l.b16 %v2048
        %v2128 = vunpack.c.l.b16 %v2049
        %v2129 = vunpack.c.l.b16 %v2050
        %v2130 = vunpack.c.l.b16 %v2051
        %v2131 = vunpack.c.l.b16 %v2052
        %v2132 = vunpack.c.l.b16 %v2053
        %v2133 = vunpack.c.l.b16 %v2054
        %v2134 = vunpack.c.l.b16 %v2055
        %v2135 = vunpack.c.l.b16 %v2056
        %v2136 = vunpack.c.l.b16 %v2057
        %v2137 = vunpack.c.l.b16 %v2058
        %v2138 = vunpack.c.l.b16 %v2059
        %v2139 = vunpack.c.l.b16 %v2060
        %v2140 = vunpack.c.l.b16 %v2061
        %v2141 = vunpack.c.l.b16 %v2062
        %v2142 = vunpack.c.l.b16 %v2063
        %v2143 = vunpack.c.l.b16 %v2064
        %v2144 = vunpack.c.l.b16 %v2065
        %v2145 = vunpack.c.l.b16 %v2066
        %v2146 = vunpack.c.l.b16 %v2067
        %v2147 = vunpack.c.l.b16 %v2068
        %v2148 = vunpack.c.l.b16 %v2069
        %v2149 = vunpack.c.l.b16 %v2070
        %v2150 = vunpack.c.l.b16 %v2071
        %v2151 = vpack.c.b16 %v2116, %v2115
        %v2152 = vpack.c.b16 %v2118, %v2117
        %v2153 = vpack.c.b16 %v2120, %v2119
        %v2154 = vpack.c.b16 %v2122, %v2121
        %v2155 = vpack.c.b16 %v2124, %v2123
        %v2156 = vpack.c.b16 %v2126, %v2125
        %v2157 = vpack.c.b16 %v2128, %v2127
        %v2158 = vpack.c.b16 %v2130, %v2129
        %v2159 = vpack.c.b16 %v2132, %v2131
        %v2160 = vpack.c.b16 %v2134, %v2133
        %v2161 = vpack.c.b16 %v2136, %v2135
        %v2162 = vpack.c.b16 %v2138, %v2137
        %v2163 = vpack.c.b16 %v2140, %v2139
        %v2164 = vpack.c.b16 %v2142, %v2141
        %v2165 = vpack.c.b16 %v2144, %v2143
        %v2166 = vpack.c.b16 %v2146, %v2145
        %v2167 = vpack.c.b16 %v2148, %v2147
        %v2168 = vpack.c.b16 %v2150, %v2149
        %v2188 = vsel %vm406, %v2032, 0
        %v2191 = vsel %vm406, %v2035, 0
        %2193 = vmatprep.subr.bf16.mxu0 0
        %2194 = vmatpush1.bf16.msra.mxu0 %v2151
        %2195 = vmatprep.subr.bf16.mxu0 0
        %2196 = vmatpush1.bf16.msra.mxu0 %v2152
        %2197 = vmatprep.subr.bf16.mxu0 0
        %2198 = vmatpush1.bf16.msra.mxu0 %v2153
        %2199 = vmatprep.subr.bf16.mxu0 0
        %2200 = vmatpush1.bf16.msra.mxu0 %v2154
        %2201 = vmatprep.subr.bf16.mxu0 0
        %2202 = vmatpush1.bf16.msra.mxu0 %v2155
        %2203 = vmatprep.subr.bf16.mxu0 0
        %2204 = vmatpush1.bf16.msra.mxu0 %v2156
        %2205 = vmatprep.subr.bf16.mxu0 0
        %2206 = vmatpush1.bf16.msra.mxu0 %v2157
        %2207 = vmatprep.subr.bf16.mxu0 0
        %2208 = vmatpush1.bf16.msra.mxu0 %v2158
        %2209 = vmatprep.subr.bf16.mxu0 0
        %2210 = vmatpush1.bf16.msra.mxu0 %v2159
        %2211 = vmatprep.subr.bf16.mxu0 0
        %2212 = vmatpush1.bf16.msra.mxu0 %v2160
        %2213 = vmatprep.subr.bf16.mxu0 0
        %2214 = vmatpush1.bf16.msra.mxu0 %v2161
        %2215 = vmatprep.subr.bf16.mxu0 0
        %2216 = vmatpush1.bf16.msra.mxu0 %v2162
        %2217 = vmatprep.subr.bf16.mxu0 0
        %2218 = vmatpush1.bf16.msra.mxu0 %v2163
        %2219 = vmatprep.subr.bf16.mxu0 0
        %2220 = vmatpush1.bf16.msra.mxu0 %v2164
        %2221 = vmatprep.subr.bf16.mxu0 0
        %2222 = vmatpush1.bf16.msra.mxu0 %v2165
        %2223 = vmatprep.subr.bf16.mxu0 0
        %2224 = vmatpush1.bf16.msra.mxu0 %v2166
        %2225 = vmatprep.mubr.bf16.mxu0 %v2031
        %2226 = vmatmul.mubr.bf16.gmra.mrb[0].mxu0 %v2030
        %v2227 = vpop.f32.mrb[0].mxu0
        %v2228 = vpop.f32.mrb[0].mxu0
        %v2229 = vpop.f32.mrb[0].mxu0
        %v2230 = vadd.f32 %v2077, %v2229
        %v2231 = vpop.f32.mrb[0].mxu0
        %2232 = vmatprep.mubr.bf16.mxu0 %v2034
        %2233 = vmatmul.mubr.bf16.gmra.mrb[0].mxu0 %v2033
        %v2234 = vpop.f32.mrb[0].mxu0
        %v2235 = vadd.f32 %v2077, %v2234
        %v2236 = vpop.f32.mrb[0].mxu0
        %v2237 = vpop.f32.mrb[0].mxu0
        %v2238 = vadd.f32 %v2077, %v2237
        %v2239 = vpop.f32.mrb[0].mxu0
        %2240 = vdwg.mxu0
        %2241 = vmatprep.subr.bf16.mxu0 0
        %2242 = vmatpush1.bf16.msra.mxu0 %v2167
        %2243 = vmatprep.subr.bf16.mxu0 0
        %2244 = vmatpush1.bf16.msra.mxu0 %v2168
        %2245 = vmatprep.subr.bf16.mxu0 0
        %2246 = vmatpush1.bf16.msra.mxu0 0
        %2247 = vmatprep.subr.bf16.mxu0 0
        %2248 = vmatpush1.bf16.msra.mxu0 0
        %2249 = vmatprep.subr.bf16.mxu0 0
        %2250 = vmatpush1.bf16.msra.mxu0 0
        %2251 = vmatprep.subr.bf16.mxu0 0
        %2252 = vmatpush1.bf16.msra.mxu0 0
        %2253 = vmatprep.subr.bf16.mxu0 0
        %2254 = vmatpush1.bf16.msra.mxu0 0
        %2255 = vmatprep.subr.bf16.mxu0 0
        %2256 = vmatpush1.bf16.msra.mxu0 0
        %2257 = vmatprep.subr.bf16.mxu0 0
        %2258 = vmatpush1.bf16.msra.mxu0 0
        %2259 = vmatprep.subr.bf16.mxu0 0
        %2260 = vmatpush1.bf16.msra.mxu0 0
        %2261 = vmatprep.subr.bf16.mxu0 0
        %2262 = vmatpush1.bf16.msra.mxu0 0
        %2263 = vmatprep.subr.bf16.mxu0 0
        %2264 = vmatpush1.bf16.msra.mxu0 0
        %2265 = vmatprep.subr.bf16.mxu0 0
        %2266 = vmatpush1.bf16.msra.mxu0 0
        %2267 = vmatprep.subr.bf16.mxu0 0
        %2268 = vmatpush1.bf16.msra.mxu0 0
        %2269 = vmatprep.subr.bf16.mxu0 0
        %2270 = vmatpush1.bf16.msra.mxu0 0
        %2271 = vmatprep.subr.bf16.mxu0 0
        %2272 = vmatpush1.bf16.msra.mxu0 0
        %2273 = vmatprep.mubr.bf16.mxu0 0
        %2274 = vmatmul.mubr.bf16.gmra.mrb[0].mxu0 %v2188
        %v2275 = vpop.f32.mrb[0].mxu0
        %v2276 = vpop.f32.mrb[0].mxu0
        %v2277 = vpop.f32.mrb[0].mxu0
        %v2278 = vadd.f32 %v2230, %v2277
        %v2279 = vpop.f32.mrb[0].mxu0
        %2280 = vmatprep.mubr.bf16.mxu0 0
        %2281 = vmatmul.mubr.bf16.gmra.mrb[0].mxu0 %v2191
        %v2282 = vpop.f32.mrb[0].mxu0
        %v2283 = vadd.f32 %v2235, %v2282
        %v2284 = vpop.f32.mrb[0].mxu0
        %v2285 = vpop.f32.mrb[0].mxu0
        %v2286 = vadd.f32 %v2238, %v2285
        %v2287 = vpop.f32.mrb[0].mxu0
        %2288 = vdwg.mxu0
        %v2289 = vmax.f32 %v2278, 0.0
        %v2290 = vmax.f32 %v2283, 0.0
        %v2291 = vmax.f32 %v2286, 0.0
        %v2294 = vrot.slane %v2289, 1
        %v2295 = vrot.slane %v2290, 1
        %v2296 = vsel %vm1423, %v2294, %v2295
        %v2298 = vmax.f32 %v2289, %v2296
        %v2300 = vrot.slane %v2291, 1
        %v2301 = vsel %vm1423, %v2295, %v2300
        %v2303 = vmax.f32 %v2290, %v2301
        %v2304 = vmax.f32 %v2298, %v2303
        %2305 = vst.msk [vmem:[%s355 - $0x1] sm:$0x2] %vm1894, %v2304
        %v2306 = vpack.c.bf16 %v2304, %v2304
        %v2307 = vld [vmem:[%s7] sm:$0xf]
        %v2308 = vld [vmem:[%s7 + $0x4] sm:$0xf]
        %v2309 = vld [vmem:[%s7 + $0x8] sm:$0xf]
        %v2310 = vld [vmem:[%s7 + $0xc] sm:$0xf]
        %v2311 = vld [vmem:[%s8] sm:$0x1]
        %v2313 = vshrl.u32 %v2306, 16
        %v2319 = vunpack.c.l.b16 %v2307
        %v2320 = vunpack.c.l.b16 %v2308
        %v2321 = vunpack.c.l.b16 %v2309
        %v2322 = vunpack.c.l.b16 %v2310
        %v2323 = vpack.c.b16 %v2320, %v2319
        %v2324 = vpack.c.b16 %v2322, %v2321
        %v2328 = vsel %vm406, %v2313, 0
        %2330 = vmatprep.subr.bf16.mxu0 0
        %2331 = vmatpush1.bf16.msra.mxu0 %v2323
        %2332 = vmatprep.subr.bf16.mxu0 0
        %2333 = vmatpush1.bf16.msra.mxu0 %v2324
        %2334 = vmatprep.subr.bf16.mxu0 0
        %2335 = vmatpush1.bf16.msra.mxu0 0
        %2336 = vmatprep.subr.bf16.mxu0 0
        %2337 = vmatpush1.bf16.msra.mxu0 0
        %2338 = vmatprep.subr.bf16.mxu0 0
        %2339 = vmatpush1.bf16.msra.mxu0 0
        %2340 = vmatprep.subr.bf16.mxu0 0
        %2341 = vmatpush1.bf16.msra.mxu0 0
        %2342 = vmatprep.subr.bf16.mxu0 0
        %2343 = vmatpush1.bf16.msra.mxu0 0
        %2344 = vmatprep.subr.bf16.mxu0 0
        %2345 = vmatpush1.bf16.msra.mxu0 0
        %2346 = vmatprep.subr.bf16.mxu0 0
        %2347 = vmatpush1.bf16.msra.mxu0 0
        %2348 = vmatprep.subr.bf16.mxu0 0
        %2349 = vmatpush1.bf16.msra.mxu0 0
        %2350 = vmatprep.subr.bf16.mxu0 0
        %2351 = vmatpush1.bf16.msra.mxu0 0
        %2352 = vmatprep.subr.bf16.mxu0 0
        %2353 = vmatpush1.bf16.msra.mxu0 0
        %2354 = vmatprep.subr.bf16.mxu0 0
        %2355 = vmatpush1.bf16.msra.mxu0 0
        %2356 = vmatprep.subr.bf16.mxu0 0
        %2357 = vmatpush1.bf16.msra.mxu0 0
        %2358 = vmatprep.subr.bf16.mxu0 0
        %2359 = vmatpush1.bf16.msra.mxu0 0
        %2360 = vmatprep.subr.bf16.mxu0 0
        %2361 = vmatpush1.bf16.msra.mxu0 0
        %2362 = vmatprep.mubr.bf16.mxu0 0
        %2363 = vmatmul.mubr.bf16.gmra.mrb[0].mxu0 %v2328
        %v2364 = vpop.f32.mrb[0].mxu0
        %v2365 = vadd.f32 %v2311, %v2364
        %v2366 = vpop.f32.mrb[0].mxu0
        %v2367 = vpop.f32.mrb[0].mxu0
        %v2368 = vpop.f32.mrb[0].mxu0
        %2369 = vdwg.mxu0
        %vm2370 = vcmask 73728
        %2371 = vst.msk [vmem:[%s361] sm:$0x1] %vm2370, %v2365
        %s2372 = sand.u32 %s230, 1
        %s2373 = scalar_lea.sflag [#allocation6], %s2372
        %s2374 = sand.u32 %s230, 1
        %s2375 = scalar_lea.vmem [#allocation5], %s2374
        %s2376 = sand.u32 %s256, 1
        %s2377 = scalar_lea.sflag [#allocation8], %s2376
        %s2378 = sand.u32 %s256, 1
        %s2379 = scalar_lea.vmem [#allocation7], %s2378
        // Predicated region
        $region57: #{svhn_forward.1} parent=55 // pred_check
          %p2380 = pneg %p240
        $region58: #{svhn_forward.1} parent=55 // pred_check_branch
          %2382 = sbr.rel (%p2380) target = $region60
        $region59: #{svhn_forward.1} parent=55 // pred_region
          %s2384 = ssub.s32 16, 16
          %2385 = vsyncadd %s2373, %s2384
          %s2386 = smul.addr %s28, 16
          %s2387 = scalar_lea.hbm %s9, %s2386
          %s2389 = sshll.u32 %s2375, 4
          %s2390 = int_to_ptr.vmem [resolvable:$true] %s2389
          %2392 = dma.vmem_to_hbm [thread:$0]  %s2390, 16, %s2387, %s2373
        $region60: #{svhn_forward.1} parent=55 // pred_fallthru
          _
        // Predicated region
        $region61: #{svhn_forward.1} parent=55 // pred_check
          %p2393 = pneg %p266
        $region62: #{svhn_forward.1} parent=55 // pred_check_branch
          %2395 = sbr.rel (%p2393) target = $region64
        $region63: #{svhn_forward.1} parent=55 // pred_region
          %s2397 = ssub.s32 16, 16
          %2398 = vsyncadd %s2377, %s2397
          %s2399 = smul.addr %s28, 16
          %s2400 = scalar_lea.hbm %s10, %s2399
          %s2402 = sshll.u32 %s2379, 4
          %s2403 = int_to_ptr.vmem [resolvable:$true] %s2402
          %2405 = dma.vmem_to_hbm [thread:$0]  %s2403, 16, %s2400, %s2377
        $region64: #{svhn_forward.1} parent=55 // pred_fallthru
          _
      $region56: #{svhn_forward.1} parent=5 // pred_fallthru
        _
      %p2406 = scmp.le.s32.totalorder 2, %s23
      // Predicated region
      $region65: #{svhn_forward.1} parent=5 // pred_check
        %p2407 = pneg %p2406
      $region66: #{svhn_forward.1} parent=5 // pred_check_branch
        %2409 = sbr.rel (%p2407) target = $region68
      $region67: #{svhn_forward.1} parent=5 // pred_region
        %s2410 = ssub.s32 %s23, 2
        // Predicated region
        $region69: #{svhn_forward.1} parent=67 // pred_check
          %p2411 = pneg %p246
        $region70: #{svhn_forward.1} parent=67 // pred_check_branch
          %2413 = sbr.rel (%p2411) target = $region72
        $region71: #{svhn_forward.1} parent=67 // pred_region
          %s2414 = sand.u32 %s231, 1
          %s2415 = scalar_lea.sflag [#allocation6], %s2414
          %s2416 = sand.u32 %s231, 1
          %s2417 = scalar_lea.vmem [#allocation5], %s2416
          %2418 = dma.done %s2415, 16
        $region72: #{svhn_forward.1} parent=67 // pred_fallthru
          _
        // Predicated region
        $region73: #{svhn_forward.1} parent=67 // pred_check
          %p2419 = pneg %p272
        $region74: #{svhn_forward.1} parent=67 // pred_check_branch
          %2421 = sbr.rel (%p2419) target = $region76
        $region75: #{svhn_forward.1} parent=67 // pred_region
          %s2422 = sand.u32 %s257, 1
          %s2423 = scalar_lea.sflag [#allocation8], %s2422
          %s2424 = sand.u32 %s257, 1
          %s2425 = scalar_lea.vmem [#allocation7], %s2424
          %2426 = dma.done %s2423, 16
        $region76: #{svhn_forward.1} parent=67 // pred_fallthru
          _
      $region68: #{svhn_forward.1} parent=5 // pred_fallthru
        _
    $region6: #{svhn_forward.1} parent=1 // loop_footer
      %s27 = sadd.s32 1, %s23
    $region7: #{svhn_forward.1} parent=1 // loop_footer_branch
      %22 = sbr.rel target = $region3
    $region8: #{svhn_forward.1} parent=1 // loop_exit
      _
    %2427 = vsyncpa [#allocation6], 1
    %s2428 = scalar_lea.sflag [#allocation6], 1
    %2429 = vsyncpa %s2428, 1
    %2430 = vsyncpa [#allocation8], 1
    %s2431 = scalar_lea.sflag [#allocation8], 1
    %2432 = vsyncpa %s2431, 1

</llo_original>
